<compile_context>
chip_gen: v7x
topology: tpu7x:2x2x1
jax: 0.10.0
libtpu: 0.0.40
codegen_flags: <defaults>
</compile_context>

<pallas_src>
import numpy as np
import jax
import jax.numpy as jnp
from jax.experimental import pallas as pl
from jax.experimental.pallas import tpu as pltpu


def conv3x3_hardswish(x_nchw, w_oihw, b):
    """x: (N, Cin, H, W) f32, w: (Cout, Cin, 3, 3), b: (Cout,) -> (N, Cout, H, W)."""
    N, Cin, H, W = x_nchw.shape
    Cout = w_oihw.shape[0]
    HW = H * W
    NHW = N * HW
    PAD = W + 1                      # halo so every tap shift is an in-bounds slice
    assert HW % 128 == 0, "H*W must be a multiple of 128 for lane-dense stores"

    # ---- wrapper-side prep (tiny, no 9x patch expansion) -------------------
    # flat input (Cin, N*H*W): column index p = n*HW + h*W + w
    xt = jnp.transpose(x_nchw, (1, 0, 2, 3)).reshape(Cin, NHW)
    xf = jnp.pad(xt, ((0, 0), (PAD, PAD)))                    # (Cin, NHW + 2*PAD)

    # per-tap weights (9, Cout, Cin), tap order t = kh*3 + kw
    w9 = jnp.transpose(w_oihw, (2, 3, 0, 1)).reshape(9, Cout, Cin)
    b2 = b.reshape(Cout, 1)

    # per-tap shifts and validity masks (static shapes -> XLA constants)
    p = np.arange(NHW)
    hh = (p // W) % H
    ww = p % W
    shifts = []
    mask_list = []
    for kh in range(3):
        for kw in range(3):
            dh, dw = kh - 1, kw - 1
            shifts.append(dh * W + dw)
            valid = ((hh + dh >= 0) & (hh + dh < H) &
                     (ww + dw >= 0) & (ww + dw < W))
            mask_list.append(valid)
    masks = jnp.asarray(np.stack(mask_list)[:, None, :].astype(np.float32))  # (9,1,NHW)

    # ---- kernel -------------------------------------------------------------
    def kernel(w_ref, b_ref, m_ref, x_ref, o_ref):
        # w_ref: (9, Cout, Cin)   b_ref: (Cout, 1)   m_ref: (9, 1, NHW)
        # x_ref: (Cin, NHW+2*PAD) o_ref: (N, Cout, HW)
        acc = jnp.broadcast_to(b_ref[...], (Cout, NHW)).astype(jnp.float32)
        for t in range(9):
            start = PAD + shifts[t]                     # static python int
            win = x_ref[:, start:start + NHW]           # (Cin, NHW) shifted window
            if shifts[t] != 0:
                win = win * m_ref[t]                    # zero invalid / cross-batch taps
            acc = acc + jnp.dot(w_ref[t], win,
                                preferred_element_type=jnp.float32)
        v4 = jnp.clip(acc + 3.0, 0.0, 6.0)              # (v1 + 3).clamp(0, 6)
        res = acc * v4 * (1.0 / 6.0)                    # v1 * v4 / 6
        for n in range(N):                              # static, lane-aligned stores
            o_ref[n] = res[:, n * HW:(n + 1) * HW].astype(o_ref.dtype)

    out = pl.pallas_call(
        kernel,
        out_shape=jax.ShapeDtypeStruct((N, Cout, HW), x_nchw.dtype),
        grid_spec=pltpu.PrefetchScalarGridSpec(
            num_scalar_prefetch=0,
            grid=(1,),
            in_specs=[
                pl.BlockSpec((9, Cout, Cin), lambda i: (0, 0, 0)),
                pl.BlockSpec((Cout, 1), lambda i: (0, 0)),
                pl.BlockSpec((9, 1, NHW), lambda i: (0, 0, 0)),
                pl.BlockSpec((Cin, NHW + 2 * PAD), lambda i: (0, 0)),
            ],
            out_specs=pl.BlockSpec((N, Cout, HW), lambda i: (0, 0, 0)),
        ),
        compiler_params=pltpu.CompilerParams(
            dimension_semantics=("arbitrary",),
        ),
    )(w9, b2, masks, xf)

    # Output is already (N, Cout, H*W) in NCHW order: reshape only (no transpose).
    return out.reshape(N, Cout, H, W)


conv3x3_hardswish_jit = jax.jit(conv3x3_hardswish)


def reference(x_nchw, w_oihw, b):
    """Pure-JAX reference for correctness checking."""
    v1 = jax.lax.conv_general_dilated(
        x_nchw, w_oihw,
        window_strides=(1, 1), padding=((1, 1), (1, 1)),
        dimension_numbers=("NCHW", "OIHW", "NCHW"),
    ) + b.reshape(1, -1, 1, 1)
    v4 = jnp.clip(v1 + 3.0, 0.0, 6.0)
    return v1 * v4 / 6.0


if __name__ == "__main__":
    key = jax.random.PRNGKey(0)
    kx, kw, kb = jax.random.split(key, 3)

    N, Cin, Cout, H, W = 2, 16, 32, 16, 16  # Cin/Cout fixed by conv1's definition

    x = jax.random.normal(kx, (N, Cin, H, W), dtype=jnp.float32)
    # Deterministic Kaiming-uniform-ish init for conv1 (Cout, Cin, 3, 3) + bias.
    fan_in = Cin * 3 * 3
    bound = 1.0 / (fan_in ** 0.5)
    w1 = jax.random.uniform(kw, (Cout, Cin, 3, 3), jnp.float32, -bound, bound)
    b1 = jax.random.uniform(kb, (Cout,), jnp.float32, -bound, bound)

    out = conv3x3_hardswish_jit(x, w1, b1)
    out = jax.block_until_ready(out)

    ref = reference(x, w1, b1)
    assert out.shape == (N, Cout, H, W), out.shape
    assert jnp.allclose(out, ref, atol=1e-4, rtol=1e-4), (
        float(jnp.max(jnp.abs(out - ref)))
    )
    print("KERNEL_OK")
</pallas_src>

<mosaic_0001>
module attributes {stable_mosaic.version = 11 : i64} {
  func.func @kernel(%arg0: i32, %arg1: memref<9x32x16xf32, #tpu.memory_space<vmem>>, %arg2: memref<32x1xf32, #tpu.memory_space<vmem>>, %arg3: memref<9x1x512xf32, #tpu.memory_space<vmem>>, %arg4: memref<16x546xf32, #tpu.memory_space<vmem>>, %arg5: memref<2x32x256xf32, #tpu.memory_space<vmem>>) attributes {dimension_semantics = [#tpu.dimension_semantics<arbitrary>], iteration_bounds = array<i64: 1>, scalar_prefetch = 0 : i64, scratch_operands = 0 : i64, tpu.core_type = #tpu.core_type<tc>, window_params = [{pipeline_mode = #tpu.pipeline_mode<synchronous>, transform_indices = @transform_0, window_bounds = array<i64: 9, 32, 16>}, {pipeline_mode = #tpu.pipeline_mode<synchronous>, transform_indices = @transform_1, window_bounds = array<i64: 32, 1>}, {pipeline_mode = #tpu.pipeline_mode<synchronous>, transform_indices = @transform_2, window_bounds = array<i64: 9, 1, 512>}, {pipeline_mode = #tpu.pipeline_mode<synchronous>, transform_indices = @transform_3, window_bounds = array<i64: 16, 546>}, {pipeline_mode = #tpu.pipeline_mode<synchronous>, transform_indices = @transform_4, window_bounds = array<i64: 2, 32, 256>}]} {
    %c0 = arith.constant 0 : index
    %c0_0 = arith.constant 0 : index
    %0 = vector.load %arg2[%c0, %c0_0] : memref<32x1xf32, #tpu.memory_space<vmem>>, vector<32x1xf32>
    %1 = vector.shape_cast %0 : vector<32x1xf32> to vector<32x1xf32>
    %2 = vector.broadcast %1 : vector<32x1xf32> to vector<32x512xf32>
    %c0_1 = arith.constant 0 : index
    %c0_2 = arith.constant 0 : index
    %3 = vector.load %arg4[%c0_1, %c0_2] : memref<16x546xf32, #tpu.memory_space<vmem>>, vector<16x512xf32>
    %c0_3 = arith.constant 0 : index
    %c0_4 = arith.constant 0 : index
    %c0_5 = arith.constant 0 : index
    %4 = vector.load %arg3[%c0_3, %c0_4, %c0_5] : memref<9x1x512xf32, #tpu.memory_space<vmem>>, vector<1x1x512xf32>
    %5 = vector.shape_cast %4 : vector<1x1x512xf32> to vector<1x512xf32>
    %6 = vector.broadcast %5 : vector<1x512xf32> to vector<16x512xf32>
    %7 = arith.mulf %3, %6 : vector<16x512xf32>
    %c0_6 = arith.constant 0 : index
    %c0_7 = arith.constant 0 : index
    %c0_8 = arith.constant 0 : index
    %8 = vector.load %arg1[%c0_6, %c0_7, %c0_8] : memref<9x32x16xf32, #tpu.memory_space<vmem>>, vector<1x32x16xf32>
    %9 = vector.shape_cast %8 : vector<1x32x16xf32> to vector<32x16xf32>
    %cst = arith.constant dense<0.000000e+00> : vector<32x512xf32>
    %10 = tpu.matmul %9, %7, %cst {dimension_numbers = #tpu.dot_dimension_numbers<[1], [0], [0], [1], [0, 0, 1, 1], [], []>} : vector<32x16xf32>, vector<16x512xf32>, vector<32x512xf32> -> vector<32x512xf32>
    %11 = arith.addf %2, %10 : vector<32x512xf32>
    %c0_9 = arith.constant 0 : index
    %c1 = arith.constant 1 : index
    %12 = vector.load %arg4[%c0_9, %c1] : memref<16x546xf32, #tpu.memory_space<vmem>>, vector<16x512xf32>
    %c1_10 = arith.constant 1 : index
    %c0_11 = arith.constant 0 : index
    %c0_12 = arith.constant 0 : index
    %13 = vector.load %arg3[%c1_10, %c0_11, %c0_12] : memref<9x1x512xf32, #tpu.memory_space<vmem>>, vector<1x1x512xf32>
    %14 = vector.shape_cast %13 : vector<1x1x512xf32> to vector<1x512xf32>
    %15 = vector.broadcast %14 : vector<1x512xf32> to vector<16x512xf32>
    %16 = arith.mulf %12, %15 : vector<16x512xf32>
    %c1_13 = arith.constant 1 : index
    %c0_14 = arith.constant 0 : index
    %c0_15 = arith.constant 0 : index
    %17 = vector.load %arg1[%c1_13, %c0_14, %c0_15] : memref<9x32x16xf32, #tpu.memory_space<vmem>>, vector<1x32x16xf32>
    %18 = vector.shape_cast %17 : vector<1x32x16xf32> to vector<32x16xf32>
    %cst_16 = arith.constant dense<0.000000e+00> : vector<32x512xf32>
    %19 = tpu.matmul %18, %16, %cst_16 {dimension_numbers = #tpu.dot_dimension_numbers<[1], [0], [0], [1], [0, 0, 1, 1], [], []>} : vector<32x16xf32>, vector<16x512xf32>, vector<32x512xf32> -> vector<32x512xf32>
    %20 = arith.addf %11, %19 : vector<32x512xf32>
    %c0_17 = arith.constant 0 : index
    %c2 = arith.constant 2 : index
    %21 = vector.load %arg4[%c0_17, %c2] : memref<16x546xf32, #tpu.memory_space<vmem>>, vector<16x512xf32>
    %c2_18 = arith.constant 2 : index
    %c0_19 = arith.constant 0 : index
    %c0_20 = arith.constant 0 : index
    %22 = vector.load %arg3[%c2_18, %c0_19, %c0_20] : memref<9x1x512xf32, #tpu.memory_space<vmem>>, vector<1x1x512xf32>
    %23 = vector.shape_cast %22 : vector<1x1x512xf32> to vector<1x512xf32>
    %24 = vector.broadcast %23 : vector<1x512xf32> to vector<16x512xf32>
    %25 = arith.mulf %21, %24 : vector<16x512xf32>
    %c2_21 = arith.constant 2 : index
    %c0_22 = arith.constant 0 : index
    %c0_23 = arith.constant 0 : index
    %26 = vector.load %arg1[%c2_21, %c0_22, %c0_23] : memref<9x32x16xf32, #tpu.memory_space<vmem>>, vector<1x32x16xf32>
    %27 = vector.shape_cast %26 : vector<1x32x16xf32> to vector<32x16xf32>
    %cst_24 = arith.constant dense<0.000000e+00> : vector<32x512xf32>
    %28 = tpu.matmul %27, %25, %cst_24 {dimension_numbers = #tpu.dot_dimension_numbers<[1], [0], [0], [1], [0, 0, 1, 1], [], []>} : vector<32x16xf32>, vector<16x512xf32>, vector<32x512xf32> -> vector<32x512xf32>
    %29 = arith.addf %20, %28 : vector<32x512xf32>
    %c0_25 = arith.constant 0 : index
    %c16 = arith.constant 16 : index
    %30 = vector.load %arg4[%c0_25, %c16] : memref<16x546xf32, #tpu.memory_space<vmem>>, vector<16x512xf32>
    %c3 = arith.constant 3 : index
    %c0_26 = arith.constant 0 : index
    %c0_27 = arith.constant 0 : index
    %31 = vector.load %arg3[%c3, %c0_26, %c0_27] : memref<9x1x512xf32, #tpu.memory_space<vmem>>, vector<1x1x512xf32>
    %32 = vector.shape_cast %31 : vector<1x1x512xf32> to vector<1x512xf32>
    %33 = vector.broadcast %32 : vector<1x512xf32> to vector<16x512xf32>
    %34 = arith.mulf %30, %33 : vector<16x512xf32>
    %c3_28 = arith.constant 3 : index
    %c0_29 = arith.constant 0 : index
    %c0_30 = arith.constant 0 : index
    %35 = vector.load %arg1[%c3_28, %c0_29, %c0_30] : memref<9x32x16xf32, #tpu.memory_space<vmem>>, vector<1x32x16xf32>
    %36 = vector.shape_cast %35 : vector<1x32x16xf32> to vector<32x16xf32>
    %cst_31 = arith.constant dense<0.000000e+00> : vector<32x512xf32>
    %37 = tpu.matmul %36, %34, %cst_31 {dimension_numbers = #tpu.dot_dimension_numbers<[1], [0], [0], [1], [0, 0, 1, 1], [], []>} : vector<32x16xf32>, vector<16x512xf32>, vector<32x512xf32> -> vector<32x512xf32>
    %38 = arith.addf %29, %37 : vector<32x512xf32>
    %c0_32 = arith.constant 0 : index
    %c17 = arith.constant 17 : index
    %39 = vector.load %arg4[%c0_32, %c17] : memref<16x546xf32, #tpu.memory_space<vmem>>, vector<16x512xf32>
    %c4 = arith.constant 4 : index
    %c0_33 = arith.constant 0 : index
    %c0_34 = arith.constant 0 : index
    %40 = vector.load %arg1[%c4, %c0_33, %c0_34] : memref<9x32x16xf32, #tpu.memory_space<vmem>>, vector<1x32x16xf32>
    %41 = vector.shape_cast %40 : vector<1x32x16xf32> to vector<32x16xf32>
    %cst_35 = arith.constant dense<0.000000e+00> : vector<32x512xf32>
    %42 = tpu.matmul %41, %39, %cst_35 {dimension_numbers = #tpu.dot_dimension_numbers<[1], [0], [0], [1], [0, 0, 1, 1], [], []>} : vector<32x16xf32>, vector<16x512xf32>, vector<32x512xf32> -> vector<32x512xf32>
    %43 = arith.addf %38, %42 : vector<32x512xf32>
    %c0_36 = arith.constant 0 : index
    %c18 = arith.constant 18 : index
    %44 = vector.load %arg4[%c0_36, %c18] : memref<16x546xf32, #tpu.memory_space<vmem>>, vector<16x512xf32>
    %c5 = arith.constant 5 : index
    %c0_37 = arith.constant 0 : index
    %c0_38 = arith.constant 0 : index
    %45 = vector.load %arg3[%c5, %c0_37, %c0_38] : memref<9x1x512xf32, #tpu.memory_space<vmem>>, vector<1x1x512xf32>
    %46 = vector.shape_cast %45 : vector<1x1x512xf32> to vector<1x512xf32>
    %47 = vector.broadcast %46 : vector<1x512xf32> to vector<16x512xf32>
    %48 = arith.mulf %44, %47 : vector<16x512xf32>
    %c5_39 = arith.constant 5 : index
    %c0_40 = arith.constant 0 : index
    %c0_41 = arith.constant 0 : index
    %49 = vector.load %arg1[%c5_39, %c0_40, %c0_41] : memref<9x32x16xf32, #tpu.memory_space<vmem>>, vector<1x32x16xf32>
    %50 = vector.shape_cast %49 : vector<1x32x16xf32> to vector<32x16xf32>
    %cst_42 = arith.constant dense<0.000000e+00> : vector<32x512xf32>
    %51 = tpu.matmul %50, %48, %cst_42 {dimension_numbers = #tpu.dot_dimension_numbers<[1], [0], [0], [1], [0, 0, 1, 1], [], []>} : vector<32x16xf32>, vector<16x512xf32>, vector<32x512xf32> -> vector<32x512xf32>
    %52 = arith.addf %43, %51 : vector<32x512xf32>
    %c0_43 = arith.constant 0 : index
    %c32 = arith.constant 32 : index
    %53 = vector.load %arg4[%c0_43, %c32] : memref<16x546xf32, #tpu.memory_space<vmem>>, vector<16x512xf32>
    %c6 = arith.constant 6 : index
    %c0_44 = arith.constant 0 : index
    %c0_45 = arith.constant 0 : index
    %54 = vector.load %arg3[%c6, %c0_44, %c0_45] : memref<9x1x512xf32, #tpu.memory_space<vmem>>, vector<1x1x512xf32>
    %55 = vector.shape_cast %54 : vector<1x1x512xf32> to vector<1x512xf32>
    %56 = vector.broadcast %55 : vector<1x512xf32> to vector<16x512xf32>
    %57 = arith.mulf %53, %56 : vector<16x512xf32>
    %c6_46 = arith.constant 6 : index
    %c0_47 = arith.constant 0 : index
    %c0_48 = arith.constant 0 : index
    %58 = vector.load %arg1[%c6_46, %c0_47, %c0_48] : memref<9x32x16xf32, #tpu.memory_space<vmem>>, vector<1x32x16xf32>
    %59 = vector.shape_cast %58 : vector<1x32x16xf32> to vector<32x16xf32>
    %cst_49 = arith.constant dense<0.000000e+00> : vector<32x512xf32>
    %60 = tpu.matmul %59, %57, %cst_49 {dimension_numbers = #tpu.dot_dimension_numbers<[1], [0], [0], [1], [0, 0, 1, 1], [], []>} : vector<32x16xf32>, vector<16x512xf32>, vector<32x512xf32> -> vector<32x512xf32>
    %61 = arith.addf %52, %60 : vector<32x512xf32>
    %c0_50 = arith.constant 0 : index
    %c33 = arith.constant 33 : index
    %62 = vector.load %arg4[%c0_50, %c33] : memref<16x546xf32, #tpu.memory_space<vmem>>, vector<16x512xf32>
    %c7 = arith.constant 7 : index
    %c0_51 = arith.constant 0 : index
    %c0_52 = arith.constant 0 : index
    %63 = vector.load %arg3[%c7, %c0_51, %c0_52] : memref<9x1x512xf32, #tpu.memory_space<vmem>>, vector<1x1x512xf32>
    %64 = vector.shape_cast %63 : vector<1x1x512xf32> to vector<1x512xf32>
    %65 = vector.broadcast %64 : vector<1x512xf32> to vector<16x512xf32>
    %66 = arith.mulf %62, %65 : vector<16x512xf32>
    %c7_53 = arith.constant 7 : index
    %c0_54 = arith.constant 0 : index
    %c0_55 = arith.constant 0 : index
    %67 = vector.load %arg1[%c7_53, %c0_54, %c0_55] : memref<9x32x16xf32, #tpu.memory_space<vmem>>, vector<1x32x16xf32>
    %68 = vector.shape_cast %67 : vector<1x32x16xf32> to vector<32x16xf32>
    %cst_56 = arith.constant dense<0.000000e+00> : vector<32x512xf32>
    %69 = tpu.matmul %68, %66, %cst_56 {dimension_numbers = #tpu.dot_dimension_numbers<[1], [0], [0], [1], [0, 0, 1, 1], [], []>} : vector<32x16xf32>, vector<16x512xf32>, vector<32x512xf32> -> vector<32x512xf32>
    %70 = arith.addf %61, %69 : vector<32x512xf32>
    %c0_57 = arith.constant 0 : index
    %c34 = arith.constant 34 : index
    %71 = vector.load %arg4[%c0_57, %c34] : memref<16x546xf32, #tpu.memory_space<vmem>>, vector<16x512xf32>
    %c8 = arith.constant 8 : index
    %c0_58 = arith.constant 0 : index
    %c0_59 = arith.constant 0 : index
    %72 = vector.load %arg3[%c8, %c0_58, %c0_59] : memref<9x1x512xf32, #tpu.memory_space<vmem>>, vector<1x1x512xf32>
    %73 = vector.shape_cast %72 : vector<1x1x512xf32> to vector<1x512xf32>
    %74 = vector.broadcast %73 : vector<1x512xf32> to vector<16x512xf32>
    %75 = arith.mulf %71, %74 : vector<16x512xf32>
    %c8_60 = arith.constant 8 : index
    %c0_61 = arith.constant 0 : index
    %c0_62 = arith.constant 0 : index
    %76 = vector.load %arg1[%c8_60, %c0_61, %c0_62] : memref<9x32x16xf32, #tpu.memory_space<vmem>>, vector<1x32x16xf32>
    %77 = vector.shape_cast %76 : vector<1x32x16xf32> to vector<32x16xf32>
    %cst_63 = arith.constant dense<0.000000e+00> : vector<32x512xf32>
    %78 = tpu.matmul %77, %75, %cst_63 {dimension_numbers = #tpu.dot_dimension_numbers<[1], [0], [0], [1], [0, 0, 1, 1], [], []>} : vector<32x16xf32>, vector<16x512xf32>, vector<32x512xf32> -> vector<32x512xf32>
    %79 = arith.addf %70, %78 : vector<32x512xf32>
    %cst_64 = arith.constant 3.000000e+00 : f32
    %80 = vector.broadcast %cst_64 : f32 to vector<32x512xf32>
    %81 = arith.addf %79, %80 : vector<32x512xf32>
    %cst_65 = arith.constant 0.000000e+00 : f32
    %cst_66 = arith.constant 6.000000e+00 : f32
    %82 = vector.broadcast %cst_65 : f32 to vector<32x512xf32>
    %83 = arith.maximumf %82, %81 : vector<32x512xf32>
    %84 = vector.broadcast %cst_66 : f32 to vector<32x512xf32>
    %85 = arith.minimumf %84, %83 : vector<32x512xf32>
    %86 = arith.mulf %79, %85 : vector<32x512xf32>
    %cst_67 = arith.constant 0.166666672 : f32
    %87 = vector.broadcast %cst_67 : f32 to vector<32x512xf32>
    %88 = arith.mulf %86, %87 : vector<32x512xf32>
    %89 = vector.extract_strided_slice %88 {offsets = [0, 0], sizes = [32, 256], strides = [1, 1]} : vector<32x512xf32> to vector<32x256xf32>
    %c0_68 = arith.constant 0 : index
    %c0_69 = arith.constant 0 : index
    %c0_70 = arith.constant 0 : index
    %90 = vector.load %arg5[%c0_68, %c0_69, %c0_70] : memref<2x32x256xf32, #tpu.memory_space<vmem>>, vector<1x32x256xf32>
    %91 = vector.shape_cast %90 : vector<1x32x256xf32> to vector<32x256xf32>
    %92 = vector.shape_cast %89 : vector<32x256xf32> to vector<1x32x256xf32>
    tpu.vector_store %arg5[%c0_68, %c0_69, %c0_70], %92 {strides = array<i32>} : memref<2x32x256xf32, #tpu.memory_space<vmem>>, vector<1x32x256xf32>,
    %93 = vector.extract_strided_slice %88 {offsets = [0, 256], sizes = [32, 256], strides = [1, 1]} : vector<32x512xf32> to vector<32x256xf32>
    %c1_71 = arith.constant 1 : index
    %c0_72 = arith.constant 0 : index
    %c0_73 = arith.constant 0 : index
    %94 = vector.load %arg5[%c1_71, %c0_72, %c0_73] : memref<2x32x256xf32, #tpu.memory_space<vmem>>, vector<1x32x256xf32>
    %95 = vector.shape_cast %94 : vector<1x32x256xf32> to vector<32x256xf32>
    %96 = vector.shape_cast %93 : vector<32x256xf32> to vector<1x32x256xf32>
    tpu.vector_store %arg5[%c1_71, %c0_72, %c0_73], %96 {strides = array<i32>} : memref<2x32x256xf32, #tpu.memory_space<vmem>>, vector<1x32x256xf32>,
    return
  }
  func.func @transform_0(%arg0: i32) -> (i32, i32, i32) {
    %c0_i32 = arith.constant 0 : i32
    %c0_i32_0 = arith.constant 0 : i32
    %c0_i32_1 = arith.constant 0 : i32
    %c0_i32_2 = arith.constant 0 : i32
    return %c0_i32, %c0_i32_0, %c0_i32_1 : i32, i32, i32
  }
  func.func @transform_1(%arg0: i32) -> (i32, i32) {
    %c0_i32 = arith.constant 0 : i32
    %c0_i32_0 = arith.constant 0 : i32
    %c0_i32_1 = arith.constant 0 : i32
    return %c0_i32, %c0_i32_0 : i32, i32
  }
  func.func @transform_2(%arg0: i32) -> (i32, i32, i32) {
    %c0_i32 = arith.constant 0 : i32
    %c0_i32_0 = arith.constant 0 : i32
    %c0_i32_1 = arith.constant 0 : i32
    %c0_i32_2 = arith.constant 0 : i32
    return %c0_i32, %c0_i32_0, %c0_i32_1 : i32, i32, i32
  }
  func.func @transform_3(%arg0: i32) -> (i32, i32) {
    %c0_i32 = arith.constant 0 : i32
    %c0_i32_0 = arith.constant 0 : i32
    %c0_i32_1 = arith.constant 0 : i32
    return %c0_i32, %c0_i32_0 : i32, i32
  }
  func.func @transform_4(%arg0: i32) -> (i32, i32, i32) {
    %c0_i32 = arith.constant 0 : i32
    %c0_i32_0 = arith.constant 0 : i32
    %c0_i32_1 = arith.constant 0 : i32
    %c0_i32_2 = arith.constant 0 : i32
    return %c0_i32, %c0_i32_0, %c0_i32_1 : i32, i32, i32
  }
}

</mosaic_0001>

<llo_original>
// kernel: conv3x3_hardswish.1
$region0: #{conv3x3_hardswish.1}
  #allocation0 [shape = 'u32[]', space=smem, size = 0x4, offset = 0x4, fixed_abs, tag = 'smem constant byte address 0x4 - core index']
  #allocation1 [shape = 'u32[144,128]{1,0:T(1,128)}', space=vmem, size = 0x12000, scoped, tag = 'internal scratch']
  %s0 = inlined_call_operand.vmem [shape: f32[9,32,16], index: 0, kind: input, shape index: {}]
  %s1 = inlined_call_operand.vmem [shape: f32[32,1], index: 1, kind: input, shape index: {}]
  %s2 = inlined_call_operand.vmem [shape: f32[9,1,512], index: 2, kind: input, shape index: {}]
  %s3 = inlined_call_operand.vmem [shape: f32[16,546], index: 3, kind: input, shape index: {}]
  %s4 = inlined_call_operand.vmem [shape: f32[2,32,256], index: 4, kind: output, shape index: {}]
  %s5 = sld [smem:[#allocation0]]
  $region26: #{conv3x3_hardswish.1} parent=0
    _
  %s7 = ssub.s32 1, %s5
  %s8 = scalar_select 0, %s7, %s5
  // Predicated region
  $region2: #{conv3x3_hardswish.1} parent=0 // pred_check
    _
  $region3: #{conv3x3_hardswish.1} parent=0 // pred_check_branch
    %10 = sbr.rel (0) target = $region5
  $region4: #{conv3x3_hardswish.1} parent=0 // pred_region
    _
  $region5: #{conv3x3_hardswish.1} parent=0 // pred_fallthru
    _
  // Predicated region
  $region6: #{conv3x3_hardswish.1} parent=0 // pred_check
    _
  $region7: #{conv3x3_hardswish.1} parent=0 // pred_check_branch
    %12 = sbr.rel (0) target = $region9
  $region8: #{conv3x3_hardswish.1} parent=0 // pred_region
    _
  $region9: #{conv3x3_hardswish.1} parent=0 // pred_fallthru
    _
  // Predicated region
  $region10: #{conv3x3_hardswish.1} parent=0 // pred_check
    _
  $region11: #{conv3x3_hardswish.1} parent=0 // pred_check_branch
    %14 = sbr.rel (0) target = $region13
  $region12: #{conv3x3_hardswish.1} parent=0 // pred_region
    _
  $region13: #{conv3x3_hardswish.1} parent=0 // pred_fallthru
    _
  // Predicated region
  $region14: #{conv3x3_hardswish.1} parent=0 // pred_check
    _
  $region15: #{conv3x3_hardswish.1} parent=0 // pred_check_branch
    %16 = sbr.rel (0) target = $region17
  $region16: #{conv3x3_hardswish.1} parent=0 // pred_region
    _
  $region17: #{conv3x3_hardswish.1} parent=0 // pred_fallthru
    _
  %v17 = vld [vmem:[%s1] sm:$0xff]
  %v18 = vld [vmem:[%s1 + $0x8] sm:$0xff]
  %v19 = vld [vmem:[%s1 + $0x10] sm:$0xff]
  %v20 = vld [vmem:[%s1 + $0x18] sm:$0xff]
  %22 = vset.pattern.permute.xlu0 0
  %23 = vperm.xlu0 %22, %v17
  %v24 = vpop.permute.xlu0 %23
  %27 = vset.pattern.permute.xlu0 0
  %28 = vperm.xlu0 %27, %v18
  %v29 = vpop.permute.xlu0 %28
  %32 = vset.pattern.permute.xlu0 0
  %33 = vperm.xlu0 %32, %v19
  %v34 = vpop.permute.xlu0 %33
  %37 = vset.pattern.permute.xlu0 0
  %38 = vperm.xlu0 %37, %v20
  %v39 = vpop.permute.xlu0 %38
  %v41 = vld [vmem:[%s3] sm:$0xff]
  %v42 = vld [vmem:[%s3 + $0x8] sm:$0xff]
  %v43 = vld [vmem:[%s3 + $0x10] sm:$0xff]
  %v44 = vld [vmem:[%s3 + $0x18] sm:$0xff]
  %v45 = vld [vmem:[%s3 + $0x28] sm:$0xff]
  %v46 = vld [vmem:[%s3 + $0x30] sm:$0xff]
  %v47 = vld [vmem:[%s3 + $0x38] sm:$0xff]
  %v48 = vld [vmem:[%s3 + $0x40] sm:$0xff]
  %v49 = vld [vmem:[%s2] sm:$0xf]
  %v51 = vlaneseq
  %v52 = vshrl.u32 %v51, 7
  %v53 = vsub.s32 0, %v52
  %v54 = vrot.slane %v49, %v53
  %v55 = vlaneseq
  %v56 = vshrl.u32 %v55, 7
  %v57 = vsub.s32 1, %v56
  %v58 = vrot.slane %v49, %v57
  %v59 = vlaneseq
  %v60 = vshrl.u32 %v59, 7
  %v61 = vsub.s32 2, %v60
  %v62 = vrot.slane %v49, %v61
  %v63 = vlaneseq
  %v64 = vshrl.u32 %v63, 7
  %v65 = vsub.s32 3, %v64
  %v66 = vrot.slane %v49, %v65
  %v71 = vmul.f32 %v41, %v54
  %v72 = vmul.f32 %v42, %v58
  %v73 = vmul.f32 %v43, %v62
  %v74 = vmul.f32 %v44, %v66
  %v75 = vmul.f32 %v45, %v54
  %v76 = vmul.f32 %v46, %v58
  %v77 = vmul.f32 %v47, %v62
  %v78 = vmul.f32 %v48, %v66
  %v79 = vld [vmem:[%s0] sm:$0xff]
  %v80 = vld [vmem:[%s0 + $0x8] sm:$0xff]
  %v81 = vld [vmem:[%s0 + $0x10] sm:$0xff]
  %v82 = vld [vmem:[%s0 + $0x18] sm:$0xff]
  %vm83 = vcmask 130048
  %v85 = vsel %vm83, %v79, 0
  %v88 = vsel %vm83, %v80, 0
  %v91 = vsel %vm83, %v81, 0
  %v94 = vsel %vm83, %v82, 0
  %96 = vmatprep.subr.mxu0 %v72
  %97 = vmatpush1.msra.mxu0 %v71
  %98 = vmatprep.subr.mxu0 %v76
  %99 = vmatpush1.msra.mxu0 %v75
  %100 = vmatprep.subr.mxu0 0.0
  %101 = vmatpush1.msra.mxu0 0.0
  %102 = vmatprep.subr.mxu0 0.0
  %103 = vmatpush1.msra.mxu0 0.0
  %104 = vmatprep.subr.mxu0 0.0
  %105 = vmatpush1.msra.mxu0 0.0
  %106 = vmatprep.subr.mxu0 0.0
  %107 = vmatpush1.msra.mxu0 0.0
  %108 = vmatprep.subr.mxu0 0.0
  %109 = vmatpush1.msra.mxu0 0.0
  %110 = vmatprep.subr.mxu0 0.0
  %111 = vmatpush1.msra.mxu0 0.0
  %112 = vmatprep.subr.mxu0 0.0
  %113 = vmatpush1.msra.mxu0 0.0
  %114 = vmatprep.subr.mxu0 0.0
  %115 = vmatpush1.msra.mxu0 0.0
  %116 = vmatprep.subr.mxu0 0.0
  %117 = vmatpush1.msra.mxu0 0.0
  %118 = vmatprep.subr.mxu0 0.0
  %119 = vmatpush1.msra.mxu0 0.0
  %120 = vmatprep.subr.mxu0 0.0
  %121 = vmatpush1.msra.mxu0 0.0
  %122 = vmatprep.subr.mxu0 0.0
  %123 = vmatpush1.msra.mxu0 0.0
  %124 = vmatprep.subr.mxu0 0.0
  %125 = vmatpush1.msra.mxu0 0.0
  %126 = vmatprep.subr.mxu0 0.0
  %127 = vmatpush1.msra.mxu0 0.0
  %128 = vmatprep.subr.mxu0 0.0
  %129 = vmatpush1.msra.mxu0 0.0
  %130 = vmatprep.subr.mxu0 0.0
  %131 = vmatpush1.msra.mxu0 0.0
  %132 = vmatprep.subr.mxu0 0.0
  %133 = vmatpush1.msra.mxu0 0.0
  %134 = vmatprep.subr.mxu0 0.0
  %135 = vmatpush1.msra.mxu0 0.0
  %136 = vmatprep.subr.mxu0 0.0
  %137 = vmatpush1.msra.mxu0 0.0
  %138 = vmatprep.subr.mxu0 0.0
  %139 = vmatpush1.msra.mxu0 0.0
  %140 = vmatprep.subr.mxu0 0.0
  %141 = vmatpush1.msra.mxu0 0.0
  %142 = vmatprep.subr.mxu0 0.0
  %143 = vmatpush1.msra.mxu0 0.0
  %144 = vmatprep.subr.mxu0 0.0
  %145 = vmatpush1.msra.mxu0 0.0
  %146 = vmatprep.subr.mxu0 0.0
  %147 = vmatpush1.msra.mxu0 0.0
  %148 = vmatprep.subr.mxu0 0.0
  %149 = vmatpush1.msra.mxu0 0.0
  %150 = vmatprep.subr.mxu0 0.0
  %151 = vmatpush1.msra.mxu0 0.0
  %152 = vmatprep.subr.mxu0 0.0
  %153 = vmatpush1.msra.mxu0 0.0
  %154 = vmatprep.subr.mxu0 0.0
  %155 = vmatpush1.msra.mxu0 0.0
  %156 = vmatprep.subr.mxu0 0.0
  %157 = vmatpush1.msra.mxu0 0.0
  %158 = vmatprep.subr.mxu0 0.0
  %159 = vmatpush1.msra.mxu0 0.0
  %160 = vmatprep.mubr.f32.mxu0 0.0
  %161 = vmatmul.mubr.f32.gmra.mrb[0].mxu0 %v85
  %v162 = vpop.f32.mrb[0].mxu0
  %v163 = vadd.f32 0.0, %v162
  %v164 = vpop.f32.mrb[0].mxu0
  %v165 = vadd.f32 0.0, %v164
  %166 = vmatprep.mubr.f32.mxu0 0.0
  %167 = vmatmul.mubr.f32.gmra.mrb[0].mxu0 %v88
  %v168 = vpop.f32.mrb[0].mxu0
  %v169 = vadd.f32 0.0, %v168
  %v170 = vpop.f32.mrb[0].mxu0
  %v171 = vadd.f32 0.0, %v170
  %172 = vmatprep.mubr.f32.mxu0 0.0
  %173 = vmatmul.mubr.f32.gmra.mrb[0].mxu0 %v91
  %v174 = vpop.f32.mrb[0].mxu0
  %v175 = vadd.f32 0.0, %v174
  %v176 = vpop.f32.mrb[0].mxu0
  %v177 = vadd.f32 0.0, %v176
  %178 = vmatprep.mubr.f32.mxu0 0.0
  %179 = vmatmul.mubr.f32.gmra.mrb[0].mxu0 %v94
  %v180 = vpop.f32.mrb[0].mxu0
  %v181 = vadd.f32 0.0, %v180
  %v182 = vpop.f32.mrb[0].mxu0
  %v183 = vadd.f32 0.0, %v182
  %184 = vdwg.mxu0
  %185 = vmatprep.subr.mxu0 %v74
  %186 = vmatpush1.msra.mxu0 %v73
  %187 = vmatprep.subr.mxu0 %v78
  %188 = vmatpush1.msra.mxu0 %v77
  %189 = vmatprep.subr.mxu0 0.0
  %190 = vmatpush1.msra.mxu0 0.0
  %191 = vmatprep.subr.mxu0 0.0
  %192 = vmatpush1.msra.mxu0 0.0
  %193 = vmatprep.subr.mxu0 0.0
  %194 = vmatpush1.msra.mxu0 0.0
  %195 = vmatprep.subr.mxu0 0.0
  %196 = vmatpush1.msra.mxu0 0.0
  %197 = vmatprep.subr.mxu0 0.0
  %198 = vmatpush1.msra.mxu0 0.0
  %199 = vmatprep.subr.mxu0 0.0
  %200 = vmatpush1.msra.mxu0 0.0
  %201 = vmatprep.subr.mxu0 0.0
  %202 = vmatpush1.msra.mxu0 0.0
  %203 = vmatprep.subr.mxu0 0.0
  %204 = vmatpush1.msra.mxu0 0.0
  %205 = vmatprep.subr.mxu0 0.0
  %206 = vmatpush1.msra.mxu0 0.0
  %207 = vmatprep.subr.mxu0 0.0
  %208 = vmatpush1.msra.mxu0 0.0
  %209 = vmatprep.subr.mxu0 0.0
  %210 = vmatpush1.msra.mxu0 0.0
  %211 = vmatprep.subr.mxu0 0.0
  %212 = vmatpush1.msra.mxu0 0.0
  %213 = vmatprep.subr.mxu0 0.0
  %214 = vmatpush1.msra.mxu0 0.0
  %215 = vmatprep.subr.mxu0 0.0
  %216 = vmatpush1.msra.mxu0 0.0
  %217 = vmatprep.subr.mxu0 0.0
  %218 = vmatpush1.msra.mxu0 0.0
  %219 = vmatprep.subr.mxu0 0.0
  %220 = vmatpush1.msra.mxu0 0.0
  %221 = vmatprep.subr.mxu0 0.0
  %222 = vmatpush1.msra.mxu0 0.0
  %223 = vmatprep.subr.mxu0 0.0
  %224 = vmatpush1.msra.mxu0 0.0
  %225 = vmatprep.subr.mxu0 0.0
  %226 = vmatpush1.msra.mxu0 0.0
  %227 = vmatprep.subr.mxu0 0.0
  %228 = vmatpush1.msra.mxu0 0.0
  %229 = vmatprep.subr.mxu0 0.0
  %230 = vmatpush1.msra.mxu0 0.0
  %231 = vmatprep.subr.mxu0 0.0
  %232 = vmatpush1.msra.mxu0 0.0
  %233 = vmatprep.subr.mxu0 0.0
  %234 = vmatpush1.msra.mxu0 0.0
  %235 = vmatprep.subr.mxu0 0.0
  %236 = vmatpush1.msra.mxu0 0.0
  %237 = vmatprep.subr.mxu0 0.0
  %238 = vmatpush1.msra.mxu0 0.0
  %239 = vmatprep.subr.mxu0 0.0
  %240 = vmatpush1.msra.mxu0 0.0
  %241 = vmatprep.subr.mxu0 0.0
  %242 = vmatpush1.msra.mxu0 0.0
  %243 = vmatprep.subr.mxu0 0.0
  %244 = vmatpush1.msra.mxu0 0.0
  %245 = vmatprep.subr.mxu0 0.0
  %246 = vmatpush1.msra.mxu0 0.0
  %247 = vmatprep.subr.mxu0 0.0
  %248 = vmatpush1.msra.mxu0 0.0
  %249 = vmatprep.mubr.f32.mxu0 0.0
  %250 = vmatmul.mubr.f32.gmra.mrb[0].mxu0 %v85
  %v251 = vpop.f32.mrb[0].mxu0
  %v252 = vadd.f32 0.0, %v251
  %v253 = vpop.f32.mrb[0].mxu0
  %v254 = vadd.f32 0.0, %v253
  %255 = vmatprep.mubr.f32.mxu0 0.0
  %256 = vmatmul.mubr.f32.gmra.mrb[0].mxu0 %v88
  %v257 = vpop.f32.mrb[0].mxu0
  %v258 = vadd.f32 0.0, %v257
  %v259 = vpop.f32.mrb[0].mxu0
  %v260 = vadd.f32 0.0, %v259
  %261 = vmatprep.mubr.f32.mxu0 0.0
  %262 = vmatmul.mubr.f32.gmra.mrb[0].mxu0 %v91
  %v263 = vpop.f32.mrb[0].mxu0
  %v264 = vadd.f32 0.0, %v263
  %v265 = vpop.f32.mrb[0].mxu0
  %v266 = vadd.f32 0.0, %v265
  %267 = vmatprep.mubr.f32.mxu0 0.0
  %268 = vmatmul.mubr.f32.gmra.mrb[0].mxu0 %v94
  %v269 = vpop.f32.mrb[0].mxu0
  %v270 = vadd.f32 0.0, %v269
  %v271 = vpop.f32.mrb[0].mxu0
  %v272 = vadd.f32 0.0, %v271
  %273 = vdwg.mxu0
  %v274 = vadd.f32 %v24, %v163
  %v275 = vadd.f32 %v24, %v165
  %v276 = vadd.f32 %v24, %v252
  %v277 = vadd.f32 %v24, %v254
  %v278 = vadd.f32 %v29, %v169
  %v279 = vadd.f32 %v29, %v171
  %v280 = vadd.f32 %v29, %v258
  %v281 = vadd.f32 %v29, %v260
  %v282 = vadd.f32 %v34, %v175
  %v283 = vadd.f32 %v34, %v177
  %v284 = vadd.f32 %v34, %v264
  %v285 = vadd.f32 %v34, %v266
  %v286 = vadd.f32 %v39, %v181
  %v287 = vadd.f32 %v39, %v183
  %v288 = vadd.f32 %v39, %v270
  %v289 = vadd.f32 %v39, %v272
  %v290 = vld [vmem:[%s3] sm:$0xff]
  %v291 = vld [vmem:[%s3 + $0x8] sm:$0xff]
  %v292 = vld [vmem:[%s3 + $0x10] sm:$0xff]
  %v293 = vld [vmem:[%s3 + $0x18] sm:$0xff]
  %v294 = vld [vmem:[%s3 + $0x20] sm:$0xff]
  %v295 = vld [vmem:[%s3 + $0x28] sm:$0xff]
  %v296 = vld [vmem:[%s3 + $0x30] sm:$0xff]
  %v297 = vld [vmem:[%s3 + $0x38] sm:$0xff]
  %v298 = vld [vmem:[%s3 + $0x40] sm:$0xff]
  %v299 = vld [vmem:[%s3 + $0x48] sm:$0xff]
  %s300 = scalar_lea.vmem %s2, 4
  %v301 = vld [vmem:[%s300] sm:$0xf]
  %v303 = vlaneseq
  %v304 = vshrl.u32 %v303, 7
  %v305 = vsub.s32 0, %v304
  %v306 = vrot.slane %v301, %v305
  %v307 = vlaneseq
  %v308 = vshrl.u32 %v307, 7
  %v309 = vsub.s32 1, %v308
  %v310 = vrot.slane %v301, %v309
  %v311 = vlaneseq
  %v312 = vshrl.u32 %v311, 7
  %v313 = vsub.s32 2, %v312
  %v314 = vrot.slane %v301, %v313
  %v315 = vlaneseq
  %v316 = vshrl.u32 %v315, 7
  %v317 = vsub.s32 3, %v316
  %v318 = vrot.slane %v301, %v317
  %319 = vrot.lane.b32.xlu0 %v306, 1
  %v320 = vpop.permute.xlu0 %319
  %321 = vrot.lane.b32.xlu0 %v310, 1
  %v322 = vpop.permute.xlu0 %321
  %323 = vrot.lane.b32.xlu0 %v314, 1
  %v324 = vpop.permute.xlu0 %323
  %325 = vrot.lane.b32.xlu0 %v318, 1
  %v326 = vpop.permute.xlu0 %325
  %vm327 = vcmask 7168
  %v328 = vsel %vm327, %v320, %v322
  %v329 = vsel %vm327, %v322, %v324
  %v330 = vsel %vm327, %v324, %v326
  %v336 = vmul.f32 %v290, %v320
  %v337 = vmul.f32 %v291, %v328
  %v338 = vmul.f32 %v292, %v329
  %v339 = vmul.f32 %v293, %v330
  %v340 = vmul.f32 %v294, %v326
  %v341 = vmul.f32 %v295, %v320
  %v342 = vmul.f32 %v296, %v328
  %v343 = vmul.f32 %v297, %v329
  %v344 = vmul.f32 %v298, %v330
  %v345 = vmul.f32 %v299, %v326
  %s346 = scalar_lea.vmem %s0, 32
  %v347 = vld [vmem:[%s346] sm:$0xff]
  %v348 = vld [vmem:[%s346 + $0x8] sm:$0xff]
  %v349 = vld [vmem:[%s346 + $0x10] sm:$0xff]
  %v350 = vld [vmem:[%s346 + $0x18] sm:$0xff]
  %361 = vrot.lane.b32.xlu0 %v336, 127
  %v362 = vpop.permute.xlu0 %361
  %363 = vrot.lane.b32.xlu0 %v337, 127
  %v364 = vpop.permute.xlu0 %363
  %365 = vrot.lane.b32.xlu0 %v338, 127
  %v366 = vpop.permute.xlu0 %365
  %367 = vrot.lane.b32.xlu0 %v339, 127
  %v368 = vpop.permute.xlu0 %367
  %369 = vrot.lane.b32.xlu0 %v340, 127
  %v370 = vpop.permute.xlu0 %369
  %371 = vrot.lane.b32.xlu0 %v341, 127
  %v372 = vpop.permute.xlu0 %371
  %373 = vrot.lane.b32.xlu0 %v342, 127
  %v374 = vpop.permute.xlu0 %373
  %375 = vrot.lane.b32.xlu0 %v343, 127
  %v376 = vpop.permute.xlu0 %375
  %377 = vrot.lane.b32.xlu0 %v344, 127
  %v378 = vpop.permute.xlu0 %377
  %379 = vrot.lane.b32.xlu0 %v345, 127
  %v380 = vpop.permute.xlu0 %379
  %vm381 = vcmask 1039360
  %v382 = vsel %vm381, %v362, %v364
  %v383 = vsel %vm381, %v364, %v366
  %v384 = vsel %vm381, %v366, %v368
  %v385 = vsel %vm381, %v368, %v370
  %v386 = vsel %vm381, %v372, %v374
  %v387 = vsel %vm381, %v374, %v376
  %v388 = vsel %vm381, %v376, %v378
  %v389 = vsel %vm381, %v378, %v380
  %v399 = vsel %vm83, %v347, 0
  %v402 = vsel %vm83, %v348, 0
  %v405 = vsel %vm83, %v349, 0
  %v408 = vsel %vm83, %v350, 0
  %410 = vmatprep.subr.mxu0 %v383
  %411 = vmatpush1.msra.mxu0 %v382
  %412 = vmatprep.subr.mxu0 %v387
  %413 = vmatpush1.msra.mxu0 %v386
  %414 = vmatprep.subr.mxu0 0.0
  %415 = vmatpush1.msra.mxu0 0.0
  %416 = vmatprep.subr.mxu0 0.0
  %417 = vmatpush1.msra.mxu0 0.0
  %418 = vmatprep.subr.mxu0 0.0
  %419 = vmatpush1.msra.mxu0 0.0
  %420 = vmatprep.subr.mxu0 0.0
  %421 = vmatpush1.msra.mxu0 0.0
  %422 = vmatprep.subr.mxu0 0.0
  %423 = vmatpush1.msra.mxu0 0.0
  %424 = vmatprep.subr.mxu0 0.0
  %425 = vmatpush1.msra.mxu0 0.0
  %426 = vmatprep.subr.mxu0 0.0
  %427 = vmatpush1.msra.mxu0 0.0
  %428 = vmatprep.subr.mxu0 0.0
  %429 = vmatpush1.msra.mxu0 0.0
  %430 = vmatprep.subr.mxu0 0.0
  %431 = vmatpush1.msra.mxu0 0.0
  %432 = vmatprep.subr.mxu0 0.0
  %433 = vmatpush1.msra.mxu0 0.0
  %434 = vmatprep.subr.mxu0 0.0
  %435 = vmatpush1.msra.mxu0 0.0
  %436 = vmatprep.subr.mxu0 0.0
  %437 = vmatpush1.msra.mxu0 0.0
  %438 = vmatprep.subr.mxu0 0.0
  %439 = vmatpush1.msra.mxu0 0.0
  %440 = vmatprep.subr.mxu0 0.0
  %441 = vmatpush1.msra.mxu0 0.0
  %442 = vmatprep.subr.mxu0 0.0
  %443 = vmatpush1.msra.mxu0 0.0
  %444 = vmatprep.subr.mxu0 0.0
  %445 = vmatpush1.msra.mxu0 0.0
  %446 = vmatprep.subr.mxu0 0.0
  %447 = vmatpush1.msra.mxu0 0.0
  %448 = vmatprep.subr.mxu0 0.0
  %449 = vmatpush1.msra.mxu0 0.0
  %450 = vmatprep.subr.mxu0 0.0
  %451 = vmatpush1.msra.mxu0 0.0
  %452 = vmatprep.subr.mxu0 0.0
  %453 = vmatpush1.msra.mxu0 0.0
  %454 = vmatprep.subr.mxu0 0.0
  %455 = vmatpush1.msra.mxu0 0.0
  %456 = vmatprep.subr.mxu0 0.0
  %457 = vmatpush1.msra.mxu0 0.0
  %458 = vmatprep.subr.mxu0 0.0
  %459 = vmatpush1.msra.mxu0 0.0
  %460 = vmatprep.subr.mxu0 0.0
  %461 = vmatpush1.msra.mxu0 0.0
  %462 = vmatprep.subr.mxu0 0.0
  %463 = vmatpush1.msra.mxu0 0.0
  %464 = vmatprep.subr.mxu0 0.0
  %465 = vmatpush1.msra.mxu0 0.0
  %466 = vmatprep.subr.mxu0 0.0
  %467 = vmatpush1.msra.mxu0 0.0
  %468 = vmatprep.subr.mxu0 0.0
  %469 = vmatpush1.msra.mxu0 0.0
  %470 = vmatprep.subr.mxu0 0.0
  %471 = vmatpush1.msra.mxu0 0.0
  %472 = vmatprep.subr.mxu0 0.0
  %473 = vmatpush1.msra.mxu0 0.0
  %474 = vmatprep.mubr.f32.mxu0 0.0
  %475 = vmatmul.mubr.f32.gmra.mrb[0].mxu0 %v399
  %v476 = vpop.f32.mrb[0].mxu0
  %v477 = vadd.f32 0.0, %v476
  %v478 = vpop.f32.mrb[0].mxu0
  %v479 = vadd.f32 0.0, %v478
  %480 = vmatprep.mubr.f32.mxu0 0.0
  %481 = vmatmul.mubr.f32.gmra.mrb[0].mxu0 %v402
  %v482 = vpop.f32.mrb[0].mxu0
  %v483 = vadd.f32 0.0, %v482
  %v484 = vpop.f32.mrb[0].mxu0
  %v485 = vadd.f32 0.0, %v484
  %486 = vmatprep.mubr.f32.mxu0 0.0
  %487 = vmatmul.mubr.f32.gmra.mrb[0].mxu0 %v405
  %v488 = vpop.f32.mrb[0].mxu0
  %v489 = vadd.f32 0.0, %v488
  %v490 = vpop.f32.mrb[0].mxu0
  %v491 = vadd.f32 0.0, %v490
  %492 = vmatprep.mubr.f32.mxu0 0.0
  %493 = vmatmul.mubr.f32.gmra.mrb[0].mxu0 %v408
  %v494 = vpop.f32.mrb[0].mxu0
  %v495 = vadd.f32 0.0, %v494
  %v496 = vpop.f32.mrb[0].mxu0
  %v497 = vadd.f32 0.0, %v496
  %498 = vdwg.mxu0
  %499 = vmatprep.subr.mxu0 %v385
  %500 = vmatpush1.msra.mxu0 %v384
  %501 = vmatprep.subr.mxu0 %v389
  %502 = vmatpush1.msra.mxu0 %v388
  %503 = vmatprep.subr.mxu0 0.0
  %504 = vmatpush1.msra.mxu0 0.0
  %505 = vmatprep.subr.mxu0 0.0
  %506 = vmatpush1.msra.mxu0 0.0
  %507 = vmatprep.subr.mxu0 0.0
  %508 = vmatpush1.msra.mxu0 0.0
  %509 = vmatprep.subr.mxu0 0.0
  %510 = vmatpush1.msra.mxu0 0.0
  %511 = vmatprep.subr.mxu0 0.0
  %512 = vmatpush1.msra.mxu0 0.0
  %513 = vmatprep.subr.mxu0 0.0
  %514 = vmatpush1.msra.mxu0 0.0
  %515 = vmatprep.subr.mxu0 0.0
  %516 = vmatpush1.msra.mxu0 0.0
  %517 = vmatprep.subr.mxu0 0.0
  %518 = vmatpush1.msra.mxu0 0.0
  %519 = vmatprep.subr.mxu0 0.0
  %520 = vmatpush1.msra.mxu0 0.0
  %521 = vmatprep.subr.mxu0 0.0
  %522 = vmatpush1.msra.mxu0 0.0
  %523 = vmatprep.subr.mxu0 0.0
  %524 = vmatpush1.msra.mxu0 0.0
  %525 = vmatprep.subr.mxu0 0.0
  %526 = vmatpush1.msra.mxu0 0.0
  %527 = vmatprep.subr.mxu0 0.0
  %528 = vmatpush1.msra.mxu0 0.0
  %529 = vmatprep.subr.mxu0 0.0
  %530 = vmatpush1.msra.mxu0 0.0
  %531 = vmatprep.subr.mxu0 0.0
  %532 = vmatpush1.msra.mxu0 0.0
  %533 = vmatprep.subr.mxu0 0.0
  %534 = vmatpush1.msra.mxu0 0.0
  %535 = vmatprep.subr.mxu0 0.0
  %536 = vmatpush1.msra.mxu0 0.0
  %537 = vmatprep.subr.mxu0 0.0
  %538 = vmatpush1.msra.mxu0 0.0
  %539 = vmatprep.subr.mxu0 0.0
  %540 = vmatpush1.msra.mxu0 0.0
  %541 = vmatprep.subr.mxu0 0.0
  %542 = vmatpush1.msra.mxu0 0.0
  %543 = vmatprep.subr.mxu0 0.0
  %544 = vmatpush1.msra.mxu0 0.0
  %545 = vmatprep.subr.mxu0 0.0
  %546 = vmatpush1.msra.mxu0 0.0
  %547 = vmatprep.subr.mxu0 0.0
  %548 = vmatpush1.msra.mxu0 0.0
  %549 = vmatprep.subr.mxu0 0.0
  %550 = vmatpush1.msra.mxu0 0.0
  %551 = vmatprep.subr.mxu0 0.0
  %552 = vmatpush1.msra.mxu0 0.0
  %553 = vmatprep.subr.mxu0 0.0
  %554 = vmatpush1.msra.mxu0 0.0
  %555 = vmatprep.subr.mxu0 0.0
  %556 = vmatpush1.msra.mxu0 0.0
  %557 = vmatprep.subr.mxu0 0.0
  %558 = vmatpush1.msra.mxu0 0.0
  %559 = vmatprep.subr.mxu0 0.0
  %560 = vmatpush1.msra.mxu0 0.0
  %561 = vmatprep.subr.mxu0 0.0
  %562 = vmatpush1.msra.mxu0 0.0
  %563 = vmatprep.mubr.f32.mxu0 0.0
  %564 = vmatmul.mubr.f32.gmra.mrb[0].mxu0 %v399
  %v565 = vpop.f32.mrb[0].mxu0
  %v566 = vadd.f32 0.0, %v565
  %v567 = vpop.f32.mrb[0].mxu0
  %v568 = vadd.f32 0.0, %v567
  %569 = vmatprep.mubr.f32.mxu0 0.0
  %570 = vmatmul.mubr.f32.gmra.mrb[0].mxu0 %v402
  %v571 = vpop.f32.mrb[0].mxu0
  %v572 = vadd.f32 0.0, %v571
  %v573 = vpop.f32.mrb[0].mxu0
  %v574 = vadd.f32 0.0, %v573
  %575 = vmatprep.mubr.f32.mxu0 0.0
  %576 = vmatmul.mubr.f32.gmra.mrb[0].mxu0 %v405
  %v577 = vpop.f32.mrb[0].mxu0
  %v578 = vadd.f32 0.0, %v577
  %v579 = vpop.f32.mrb[0].mxu0
  %v580 = vadd.f32 0.0, %v579
  %581 = vmatprep.mubr.f32.mxu0 0.0
  %582 = vmatmul.mubr.f32.gmra.mrb[0].mxu0 %v408
  %v583 = vpop.f32.mrb[0].mxu0
  %v584 = vadd.f32 0.0, %v583
  %v585 = vpop.f32.mrb[0].mxu0
  %v586 = vadd.f32 0.0, %v585
  %587 = vdwg.mxu0
  %v588 = vadd.f32 %v274, %v477
  %v589 = vadd.f32 %v275, %v479
  %v590 = vadd.f32 %v276, %v566
  %v591 = vadd.f32 %v277, %v568
  %v592 = vadd.f32 %v278, %v483
  %v593 = vadd.f32 %v279, %v485
  %v594 = vadd.f32 %v280, %v572
  %v595 = vadd.f32 %v281, %v574
  %v596 = vadd.f32 %v282, %v489
  %v597 = vadd.f32 %v283, %v491
  %v598 = vadd.f32 %v284, %v578
  %v599 = vadd.f32 %v285, %v580
  %v600 = vadd.f32 %v286, %v495
  %v601 = vadd.f32 %v287, %v497
  %v602 = vadd.f32 %v288, %v584
  %v603 = vadd.f32 %v289, %v586
  %s604 = scalar_lea.vmem %s2, 8
  %v605 = vld [vmem:[%s604] sm:$0xf]
  %v607 = vlaneseq
  %v608 = vshrl.u32 %v607, 7
  %v609 = vsub.s32 0, %v608
  %v610 = vrot.slane %v605, %v609
  %v611 = vlaneseq
  %v612 = vshrl.u32 %v611, 7
  %v613 = vsub.s32 1, %v612
  %v614 = vrot.slane %v605, %v613
  %v615 = vlaneseq
  %v616 = vshrl.u32 %v615, 7
  %v617 = vsub.s32 2, %v616
  %v618 = vrot.slane %v605, %v617
  %v619 = vlaneseq
  %v620 = vshrl.u32 %v619, 7
  %v621 = vsub.s32 3, %v620
  %v622 = vrot.slane %v605, %v621
  %623 = vrot.lane.b32.xlu0 %v610, 2
  %v624 = vpop.permute.xlu0 %623
  %625 = vrot.lane.b32.xlu0 %v614, 2
  %v626 = vpop.permute.xlu0 %625
  %627 = vrot.lane.b32.xlu0 %v618, 2
  %v628 = vpop.permute.xlu0 %627
  %629 = vrot.lane.b32.xlu0 %v622, 2
  %v630 = vpop.permute.xlu0 %629
  %vm631 = vcmask 15360
  %v632 = vsel %vm631, %v624, %v626
  %v633 = vsel %vm631, %v626, %v628
  %v634 = vsel %vm631, %v628, %v630
  %v640 = vmul.f32 %v290, %v624
  %v641 = vmul.f32 %v291, %v632
  %v642 = vmul.f32 %v292, %v633
  %v643 = vmul.f32 %v293, %v634
  %v644 = vmul.f32 %v294, %v630
  %v645 = vmul.f32 %v295, %v624
  %v646 = vmul.f32 %v296, %v632
  %v647 = vmul.f32 %v297, %v633
  %v648 = vmul.f32 %v298, %v634
  %v649 = vmul.f32 %v299, %v630
  %s650 = scalar_lea.vmem %s0, 64
  %v651 = vld [vmem:[%s650] sm:$0xff]
  %v652 = vld [vmem:[%s650 + $0x8] sm:$0xff]
  %v653 = vld [vmem:[%s650 + $0x10] sm:$0xff]
  %v654 = vld [vmem:[%s650 + $0x18] sm:$0xff]
  %665 = vrot.lane.b32.xlu0 %v640, 126
  %v666 = vpop.permute.xlu0 %665
  %667 = vrot.lane.b32.xlu0 %v641, 126
  %v668 = vpop.permute.xlu0 %667
  %669 = vrot.lane.b32.xlu0 %v642, 126
  %v670 = vpop.permute.xlu0 %669
  %671 = vrot.lane.b32.xlu0 %v643, 126
  %v672 = vpop.permute.xlu0 %671
  %673 = vrot.lane.b32.xlu0 %v644, 126
  %v674 = vpop.permute.xlu0 %673
  %675 = vrot.lane.b32.xlu0 %v645, 126
  %v676 = vpop.permute.xlu0 %675
  %677 = vrot.lane.b32.xlu0 %v646, 126
  %v678 = vpop.permute.xlu0 %677
  %679 = vrot.lane.b32.xlu0 %v647, 126
  %v680 = vpop.permute.xlu0 %679
  %681 = vrot.lane.b32.xlu0 %v648, 126
  %v682 = vpop.permute.xlu0 %681
  %683 = vrot.lane.b32.xlu0 %v649, 126
  %v684 = vpop.permute.xlu0 %683
  %vm685 = vcmask 1031168
  %v686 = vsel %vm685, %v666, %v668
  %v687 = vsel %vm685, %v668, %v670
  %v688 = vsel %vm685, %v670, %v672
  %v689 = vsel %vm685, %v672, %v674
  %v690 = vsel %vm685, %v676, %v678
  %v691 = vsel %vm685, %v678, %v680
  %v692 = vsel %vm685, %v680, %v682
  %v693 = vsel %vm685, %v682, %v684
  %v703 = vsel %vm83, %v651, 0
  %v706 = vsel %vm83, %v652, 0
  %v709 = vsel %vm83, %v653, 0
  %v712 = vsel %vm83, %v654, 0
  %714 = vmatprep.subr.mxu0 %v687
  %715 = vmatpush1.msra.mxu0 %v686
  %716 = vmatprep.subr.mxu0 %v691
  %717 = vmatpush1.msra.mxu0 %v690
  %718 = vmatprep.subr.mxu0 0.0
  %719 = vmatpush1.msra.mxu0 0.0
  %720 = vmatprep.subr.mxu0 0.0
  %721 = vmatpush1.msra.mxu0 0.0
  %722 = vmatprep.subr.mxu0 0.0
  %723 = vmatpush1.msra.mxu0 0.0
  %724 = vmatprep.subr.mxu0 0.0
  %725 = vmatpush1.msra.mxu0 0.0
  %726 = vmatprep.subr.mxu0 0.0
  %727 = vmatpush1.msra.mxu0 0.0
  %728 = vmatprep.subr.mxu0 0.0
  %729 = vmatpush1.msra.mxu0 0.0
  %730 = vmatprep.subr.mxu0 0.0
  %731 = vmatpush1.msra.mxu0 0.0
  %732 = vmatprep.subr.mxu0 0.0
  %733 = vmatpush1.msra.mxu0 0.0
  %734 = vmatprep.subr.mxu0 0.0
  %735 = vmatpush1.msra.mxu0 0.0
  %736 = vmatprep.subr.mxu0 0.0
  %737 = vmatpush1.msra.mxu0 0.0
  %738 = vmatprep.subr.mxu0 0.0
  %739 = vmatpush1.msra.mxu0 0.0
  %740 = vmatprep.subr.mxu0 0.0
  %741 = vmatpush1.msra.mxu0 0.0
  %742 = vmatprep.subr.mxu0 0.0
  %743 = vmatpush1.msra.mxu0 0.0
  %744 = vmatprep.subr.mxu0 0.0
  %745 = vmatpush1.msra.mxu0 0.0
  %746 = vmatprep.subr.mxu0 0.0
  %747 = vmatpush1.msra.mxu0 0.0
  %748 = vmatprep.subr.mxu0 0.0
  %749 = vmatpush1.msra.mxu0 0.0
  %750 = vmatprep.subr.mxu0 0.0
  %751 = vmatpush1.msra.mxu0 0.0
  %752 = vmatprep.subr.mxu0 0.0
  %753 = vmatpush1.msra.mxu0 0.0
  %754 = vmatprep.subr.mxu0 0.0
  %755 = vmatpush1.msra.mxu0 0.0
  %756 = vmatprep.subr.mxu0 0.0
  %757 = vmatpush1.msra.mxu0 0.0
  %758 = vmatprep.subr.mxu0 0.0
  %759 = vmatpush1.msra.mxu0 0.0
  %760 = vmatprep.subr.mxu0 0.0
  %761 = vmatpush1.msra.mxu0 0.0
  %762 = vmatprep.subr.mxu0 0.0
  %763 = vmatpush1.msra.mxu0 0.0
  %764 = vmatprep.subr.mxu0 0.0
  %765 = vmatpush1.msra.mxu0 0.0
  %766 = vmatprep.subr.mxu0 0.0
  %767 = vmatpush1.msra.mxu0 0.0
  %768 = vmatprep.subr.mxu0 0.0
  %769 = vmatpush1.msra.mxu0 0.0
  %770 = vmatprep.subr.mxu0 0.0
  %771 = vmatpush1.msra.mxu0 0.0
  %772 = vmatprep.subr.mxu0 0.0
  %773 = vmatpush1.msra.mxu0 0.0
  %774 = vmatprep.subr.mxu0 0.0
  %775 = vmatpush1.msra.mxu0 0.0
  %776 = vmatprep.subr.mxu0 0.0
  %777 = vmatpush1.msra.mxu0 0.0
  %778 = vmatprep.mubr.f32.mxu0 0.0
  %779 = vmatmul.mubr.f32.gmra.mrb[0].mxu0 %v703
  %v780 = vpop.f32.mrb[0].mxu0
  %v781 = vadd.f32 0.0, %v780
  %v782 = vpop.f32.mrb[0].mxu0
  %v783 = vadd.f32 0.0, %v782
  %784 = vmatprep.mubr.f32.mxu0 0.0
  %785 = vmatmul.mubr.f32.gmra.mrb[0].mxu0 %v706
  %v786 = vpop.f32.mrb[0].mxu0
  %v787 = vadd.f32 0.0, %v786
  %v788 = vpop.f32.mrb[0].mxu0
  %v789 = vadd.f32 0.0, %v788
  %790 = vmatprep.mubr.f32.mxu0 0.0
  %791 = vmatmul.mubr.f32.gmra.mrb[0].mxu0 %v709
  %v792 = vpop.f32.mrb[0].mxu0
  %v793 = vadd.f32 0.0, %v792
  %v794 = vpop.f32.mrb[0].mxu0
  %v795 = vadd.f32 0.0, %v794
  %796 = vmatprep.mubr.f32.mxu0 0.0
  %797 = vmatmul.mubr.f32.gmra.mrb[0].mxu0 %v712
  %v798 = vpop.f32.mrb[0].mxu0
  %v799 = vadd.f32 0.0, %v798
  %v800 = vpop.f32.mrb[0].mxu0
  %v801 = vadd.f32 0.0, %v800
  %802 = vdwg.mxu0
  %803 = vmatprep.subr.mxu0 %v689
  %804 = vmatpush1.msra.mxu0 %v688
  %805 = vmatprep.subr.mxu0 %v693
  %806 = vmatpush1.msra.mxu0 %v692
  %807 = vmatprep.subr.mxu0 0.0
  %808 = vmatpush1.msra.mxu0 0.0
  %809 = vmatprep.subr.mxu0 0.0
  %810 = vmatpush1.msra.mxu0 0.0
  %811 = vmatprep.subr.mxu0 0.0
  %812 = vmatpush1.msra.mxu0 0.0
  %813 = vmatprep.subr.mxu0 0.0
  %814 = vmatpush1.msra.mxu0 0.0
  %815 = vmatprep.subr.mxu0 0.0
  %816 = vmatpush1.msra.mxu0 0.0
  %817 = vmatprep.subr.mxu0 0.0
  %818 = vmatpush1.msra.mxu0 0.0
  %819 = vmatprep.subr.mxu0 0.0
  %820 = vmatpush1.msra.mxu0 0.0
  %821 = vmatprep.subr.mxu0 0.0
  %822 = vmatpush1.msra.mxu0 0.0
  %823 = vmatprep.subr.mxu0 0.0
  %824 = vmatpush1.msra.mxu0 0.0
  %825 = vmatprep.subr.mxu0 0.0
  %826 = vmatpush1.msra.mxu0 0.0
  %827 = vmatprep.subr.mxu0 0.0
  %828 = vmatpush1.msra.mxu0 0.0
  %829 = vmatprep.subr.mxu0 0.0
  %830 = vmatpush1.msra.mxu0 0.0
  %831 = vmatprep.subr.mxu0 0.0
  %832 = vmatpush1.msra.mxu0 0.0
  %833 = vmatprep.subr.mxu0 0.0
  %834 = vmatpush1.msra.mxu0 0.0
  %835 = vmatprep.subr.mxu0 0.0
  %836 = vmatpush1.msra.mxu0 0.0
  %837 = vmatprep.subr.mxu0 0.0
  %838 = vmatpush1.msra.mxu0 0.0
  %839 = vmatprep.subr.mxu0 0.0
  %840 = vmatpush1.msra.mxu0 0.0
  %841 = vmatprep.subr.mxu0 0.0
  %842 = vmatpush1.msra.mxu0 0.0
  %843 = vmatprep.subr.mxu0 0.0
  %844 = vmatpush1.msra.mxu0 0.0
  %845 = vmatprep.subr.mxu0 0.0
  %846 = vmatpush1.msra.mxu0 0.0
  %847 = vmatprep.subr.mxu0 0.0
  %848 = vmatpush1.msra.mxu0 0.0
  %849 = vmatprep.subr.mxu0 0.0
  %850 = vmatpush1.msra.mxu0 0.0
  %851 = vmatprep.subr.mxu0 0.0
  %852 = vmatpush1.msra.mxu0 0.0
  %853 = vmatprep.subr.mxu0 0.0
  %854 = vmatpush1.msra.mxu0 0.0
  %855 = vmatprep.subr.mxu0 0.0
  %856 = vmatpush1.msra.mxu0 0.0
  %857 = vmatprep.subr.mxu0 0.0
  %858 = vmatpush1.msra.mxu0 0.0
  %859 = vmatprep.subr.mxu0 0.0
  %860 = vmatpush1.msra.mxu0 0.0
  %861 = vmatprep.subr.mxu0 0.0
  %862 = vmatpush1.msra.mxu0 0.0
  %863 = vmatprep.subr.mxu0 0.0
  %864 = vmatpush1.msra.mxu0 0.0
  %865 = vmatprep.subr.mxu0 0.0
  %866 = vmatpush1.msra.mxu0 0.0
  %867 = vmatprep.mubr.f32.mxu0 0.0
  %868 = vmatmul.mubr.f32.gmra.mrb[0].mxu0 %v703
  %v869 = vpop.f32.mrb[0].mxu0
  %v870 = vadd.f32 0.0, %v869
  %v871 = vpop.f32.mrb[0].mxu0
  %v872 = vadd.f32 0.0, %v871
  %873 = vmatprep.mubr.f32.mxu0 0.0
  %874 = vmatmul.mubr.f32.gmra.mrb[0].mxu0 %v706
  %v875 = vpop.f32.mrb[0].mxu0
  %v876 = vadd.f32 0.0, %v875
  %v877 = vpop.f32.mrb[0].mxu0
  %v878 = vadd.f32 0.0, %v877
  %879 = vmatprep.mubr.f32.mxu0 0.0
  %880 = vmatmul.mubr.f32.gmra.mrb[0].mxu0 %v709
  %v881 = vpop.f32.mrb[0].mxu0
  %v882 = vadd.f32 0.0, %v881
  %v883 = vpop.f32.mrb[0].mxu0
  %v884 = vadd.f32 0.0, %v883
  %885 = vmatprep.mubr.f32.mxu0 0.0
  %886 = vmatmul.mubr.f32.gmra.mrb[0].mxu0 %v712
  %v887 = vpop.f32.mrb[0].mxu0
  %v888 = vadd.f32 0.0, %v887
  %v889 = vpop.f32.mrb[0].mxu0
  %v890 = vadd.f32 0.0, %v889
  %891 = vdwg.mxu0
  %v892 = vadd.f32 %v588, %v781
  %v893 = vadd.f32 %v589, %v783
  %v894 = vadd.f32 %v590, %v870
  %v895 = vadd.f32 %v591, %v872
  %v896 = vadd.f32 %v592, %v787
  %v897 = vadd.f32 %v593, %v789
  %v898 = vadd.f32 %v594, %v876
  %v899 = vadd.f32 %v595, %v878
  %v900 = vadd.f32 %v596, %v793
  %v901 = vadd.f32 %v597, %v795
  %v902 = vadd.f32 %v598, %v882
  %v903 = vadd.f32 %v599, %v884
  %v904 = vadd.f32 %v600, %v799
  %v905 = vadd.f32 %v601, %v801
  %v906 = vadd.f32 %v602, %v888
  %v907 = vadd.f32 %v603, %v890
  %s908 = scalar_lea.vmem %s2, 12
  %v909 = vld [vmem:[%s908] sm:$0xf]
  %v911 = vlaneseq
  %v912 = vshrl.u32 %v911, 7
  %v913 = vsub.s32 0, %v912
  %v914 = vrot.slane %v909, %v913
  %v915 = vlaneseq
  %v916 = vshrl.u32 %v915, 7
  %v917 = vsub.s32 1, %v916
  %v918 = vrot.slane %v909, %v917
  %v919 = vlaneseq
  %v920 = vshrl.u32 %v919, 7
  %v921 = vsub.s32 2, %v920
  %v922 = vrot.slane %v909, %v921
  %v923 = vlaneseq
  %v924 = vshrl.u32 %v923, 7
  %v925 = vsub.s32 3, %v924
  %v926 = vrot.slane %v909, %v925
  %927 = vrot.lane.b32.xlu0 %v914, 16
  %v928 = vpop.permute.xlu0 %927
  %929 = vrot.lane.b32.xlu0 %v918, 16
  %v930 = vpop.permute.xlu0 %929
  %931 = vrot.lane.b32.xlu0 %v922, 16
  %v932 = vpop.permute.xlu0 %931
  %933 = vrot.lane.b32.xlu0 %v926, 16
  %v934 = vpop.permute.xlu0 %933
  %v935 = vsel %vm83, %v928, %v930
  %v936 = vsel %vm83, %v930, %v932
  %v937 = vsel %vm83, %v932, %v934
  %v943 = vmul.f32 %v290, %v928
  %v944 = vmul.f32 %v291, %v935
  %v945 = vmul.f32 %v292, %v936
  %v946 = vmul.f32 %v293, %v937
  %v947 = vmul.f32 %v294, %v934
  %v948 = vmul.f32 %v295, %v928
  %v949 = vmul.f32 %v296, %v935
  %v950 = vmul.f32 %v297, %v936
  %v951 = vmul.f32 %v298, %v937
  %v952 = vmul.f32 %v299, %v934
  %s953 = scalar_lea.vmem %s0, 96
  %v954 = vld [vmem:[%s953] sm:$0xff]
  %v955 = vld [vmem:[%s953 + $0x8] sm:$0xff]
  %v956 = vld [vmem:[%s953 + $0x10] sm:$0xff]
  %v957 = vld [vmem:[%s953 + $0x18] sm:$0xff]
  %968 = vrot.lane.b32.xlu0 %v943, 112
  %v969 = vpop.permute.xlu0 %968
  %970 = vrot.lane.b32.xlu0 %v944, 112
  %v971 = vpop.permute.xlu0 %970
  %972 = vrot.lane.b32.xlu0 %v945, 112
  %v973 = vpop.permute.xlu0 %972
  %974 = vrot.lane.b32.xlu0 %v946, 112
  %v975 = vpop.permute.xlu0 %974
  %976 = vrot.lane.b32.xlu0 %v947, 112
  %v977 = vpop.permute.xlu0 %976
  %978 = vrot.lane.b32.xlu0 %v948, 112
  %v979 = vpop.permute.xlu0 %978
  %980 = vrot.lane.b32.xlu0 %v949, 112
  %v981 = vpop.permute.xlu0 %980
  %982 = vrot.lane.b32.xlu0 %v950, 112
  %v983 = vpop.permute.xlu0 %982
  %984 = vrot.lane.b32.xlu0 %v951, 112
  %v985 = vpop.permute.xlu0 %984
  %986 = vrot.lane.b32.xlu0 %v952, 112
  %v987 = vpop.permute.xlu0 %986
  %vm988 = vcmask 916480
  %v989 = vsel %vm988, %v969, %v971
  %v990 = vsel %vm988, %v971, %v973
  %v991 = vsel %vm988, %v973, %v975
  %v992 = vsel %vm988, %v975, %v977
  %v993 = vsel %vm988, %v979, %v981
  %v994 = vsel %vm988, %v981, %v983
  %v995 = vsel %vm988, %v983, %v985
  %v996 = vsel %vm988, %v985, %v987
  %v1006 = vsel %vm83, %v954, 0
  %v1009 = vsel %vm83, %v955, 0
  %v1012 = vsel %vm83, %v956, 0
  %v1015 = vsel %vm83, %v957, 0
  %1017 = vmatprep.subr.mxu0 %v990
  %1018 = vmatpush1.msra.mxu0 %v989
  %1019 = vmatprep.subr.mxu0 %v994
  %1020 = vmatpush1.msra.mxu0 %v993
  %1021 = vmatprep.subr.mxu0 0.0
  %1022 = vmatpush1.msra.mxu0 0.0
  %1023 = vmatprep.subr.mxu0 0.0
  %1024 = vmatpush1.msra.mxu0 0.0
  %1025 = vmatprep.subr.mxu0 0.0
  %1026 = vmatpush1.msra.mxu0 0.0
  %1027 = vmatprep.subr.mxu0 0.0
  %1028 = vmatpush1.msra.mxu0 0.0
  %1029 = vmatprep.subr.mxu0 0.0
  %1030 = vmatpush1.msra.mxu0 0.0
  %1031 = vmatprep.subr.mxu0 0.0
  %1032 = vmatpush1.msra.mxu0 0.0
  %1033 = vmatprep.subr.mxu0 0.0
  %1034 = vmatpush1.msra.mxu0 0.0
  %1035 = vmatprep.subr.mxu0 0.0
  %1036 = vmatpush1.msra.mxu0 0.0
  %1037 = vmatprep.subr.mxu0 0.0
  %1038 = vmatpush1.msra.mxu0 0.0
  %1039 = vmatprep.subr.mxu0 0.0
  %1040 = vmatpush1.msra.mxu0 0.0
  %1041 = vmatprep.subr.mxu0 0.0
  %1042 = vmatpush1.msra.mxu0 0.0
  %1043 = vmatprep.subr.mxu0 0.0
  %1044 = vmatpush1.msra.mxu0 0.0
  %1045 = vmatprep.subr.mxu0 0.0
  %1046 = vmatpush1.msra.mxu0 0.0
  %1047 = vmatprep.subr.mxu0 0.0
  %1048 = vmatpush1.msra.mxu0 0.0
  %1049 = vmatprep.subr.mxu0 0.0
  %1050 = vmatpush1.msra.mxu0 0.0
  %1051 = vmatprep.subr.mxu0 0.0
  %1052 = vmatpush1.msra.mxu0 0.0
  %1053 = vmatprep.subr.mxu0 0.0
  %1054 = vmatpush1.msra.mxu0 0.0
  %1055 = vmatprep.subr.mxu0 0.0
  %1056 = vmatpush1.msra.mxu0 0.0
  %1057 = vmatprep.subr.mxu0 0.0
  %1058 = vmatpush1.msra.mxu0 0.0
  %1059 = vmatprep.subr.mxu0 0.0
  %1060 = vmatpush1.msra.mxu0 0.0
  %1061 = vmatprep.subr.mxu0 0.0
  %1062 = vmatpush1.msra.mxu0 0.0
  %1063 = vmatprep.subr.mxu0 0.0
  %1064 = vmatpush1.msra.mxu0 0.0
  %1065 = vmatprep.subr.mxu0 0.0
  %1066 = vmatpush1.msra.mxu0 0.0
  %1067 = vmatprep.subr.mxu0 0.0
  %1068 = vmatpush1.msra.mxu0 0.0
  %1069 = vmatprep.subr.mxu0 0.0
  %1070 = vmatpush1.msra.mxu0 0.0
  %1071 = vmatprep.subr.mxu0 0.0
  %1072 = vmatpush1.msra.mxu0 0.0
  %1073 = vmatprep.subr.mxu0 0.0
  %1074 = vmatpush1.msra.mxu0 0.0
  %1075 = vmatprep.subr.mxu0 0.0
  %1076 = vmatpush1.msra.mxu0 0.0
  %1077 = vmatprep.subr.mxu0 0.0
  %1078 = vmatpush1.msra.mxu0 0.0
  %1079 = vmatprep.subr.mxu0 0.0
  %1080 = vmatpush1.msra.mxu0 0.0
  %1081 = vmatprep.mubr.f32.mxu0 0.0
  %1082 = vmatmul.mubr.f32.gmra.mrb[0].mxu0 %v1006
  %v1083 = vpop.f32.mrb[0].mxu0
  %v1084 = vadd.f32 0.0, %v1083
  %v1085 = vpop.f32.mrb[0].mxu0
  %v1086 = vadd.f32 0.0, %v1085
  %1087 = vmatprep.mubr.f32.mxu0 0.0
  %1088 = vmatmul.mubr.f32.gmra.mrb[0].mxu0 %v1009
  %v1089 = vpop.f32.mrb[0].mxu0
  %v1090 = vadd.f32 0.0, %v1089
  %v1091 = vpop.f32.mrb[0].mxu0
  %v1092 = vadd.f32 0.0, %v1091
  %1093 = vmatprep.mubr.f32.mxu0 0.0
  %1094 = vmatmul.mubr.f32.gmra.mrb[0].mxu0 %v1012
  %v1095 = vpop.f32.mrb[0].mxu0
  %v1096 = vadd.f32 0.0, %v1095
  %v1097 = vpop.f32.mrb[0].mxu0
  %v1098 = vadd.f32 0.0, %v1097
  %1099 = vmatprep.mubr.f32.mxu0 0.0
  %1100 = vmatmul.mubr.f32.gmra.mrb[0].mxu0 %v1015
  %v1101 = vpop.f32.mrb[0].mxu0
  %v1102 = vadd.f32 0.0, %v1101
  %v1103 = vpop.f32.mrb[0].mxu0
  %v1104 = vadd.f32 0.0, %v1103
  %1105 = vdwg.mxu0
  %1106 = vmatprep.subr.mxu0 %v992
  %1107 = vmatpush1.msra.mxu0 %v991
  %1108 = vmatprep.subr.mxu0 %v996
  %1109 = vmatpush1.msra.mxu0 %v995
  %1110 = vmatprep.subr.mxu0 0.0
  %1111 = vmatpush1.msra.mxu0 0.0
  %1112 = vmatprep.subr.mxu0 0.0
  %1113 = vmatpush1.msra.mxu0 0.0
  %1114 = vmatprep.subr.mxu0 0.0
  %1115 = vmatpush1.msra.mxu0 0.0
  %1116 = vmatprep.subr.mxu0 0.0
  %1117 = vmatpush1.msra.mxu0 0.0
  %1118 = vmatprep.subr.mxu0 0.0
  %1119 = vmatpush1.msra.mxu0 0.0
  %1120 = vmatprep.subr.mxu0 0.0
  %1121 = vmatpush1.msra.mxu0 0.0
  %1122 = vmatprep.subr.mxu0 0.0
  %1123 = vmatpush1.msra.mxu0 0.0
  %1124 = vmatprep.subr.mxu0 0.0
  %1125 = vmatpush1.msra.mxu0 0.0
  %1126 = vmatprep.subr.mxu0 0.0
  %1127 = vmatpush1.msra.mxu0 0.0
  %1128 = vmatprep.subr.mxu0 0.0
  %1129 = vmatpush1.msra.mxu0 0.0
  %1130 = vmatprep.subr.mxu0 0.0
  %1131 = vmatpush1.msra.mxu0 0.0
  %1132 = vmatprep.subr.mxu0 0.0
  %1133 = vmatpush1.msra.mxu0 0.0
  %1134 = vmatprep.subr.mxu0 0.0
  %1135 = vmatpush1.msra.mxu0 0.0
  %1136 = vmatprep.subr.mxu0 0.0
  %1137 = vmatpush1.msra.mxu0 0.0
  %1138 = vmatprep.subr.mxu0 0.0
  %1139 = vmatpush1.msra.mxu0 0.0
  %1140 = vmatprep.subr.mxu0 0.0
  %1141 = vmatpush1.msra.mxu0 0.0
  %1142 = vmatprep.subr.mxu0 0.0
  %1143 = vmatpush1.msra.mxu0 0.0
  %1144 = vmatprep.subr.mxu0 0.0
  %1145 = vmatpush1.msra.mxu0 0.0
  %1146 = vmatprep.subr.mxu0 0.0
  %1147 = vmatpush1.msra.mxu0 0.0
  %1148 = vmatprep.subr.mxu0 0.0
  %1149 = vmatpush1.msra.mxu0 0.0
  %1150 = vmatprep.subr.mxu0 0.0
  %1151 = vmatpush1.msra.mxu0 0.0
  %1152 = vmatprep.subr.mxu0 0.0
  %1153 = vmatpush1.msra.mxu0 0.0
  %1154 = vmatprep.subr.mxu0 0.0
  %1155 = vmatpush1.msra.mxu0 0.0
  %1156 = vmatprep.subr.mxu0 0.0
  %1157 = vmatpush1.msra.mxu0 0.0
  %1158 = vmatprep.subr.mxu0 0.0
  %1159 = vmatpush1.msra.mxu0 0.0
  %1160 = vmatprep.subr.mxu0 0.0
  %1161 = vmatpush1.msra.mxu0 0.0
  %1162 = vmatprep.subr.mxu0 0.0
  %1163 = vmatpush1.msra.mxu0 0.0
  %1164 = vmatprep.subr.mxu0 0.0
  %1165 = vmatpush1.msra.mxu0 0.0
  %1166 = vmatprep.subr.mxu0 0.0
  %1167 = vmatpush1.msra.mxu0 0.0
  %1168 = vmatprep.subr.mxu0 0.0
  %1169 = vmatpush1.msra.mxu0 0.0
  %1170 = vmatprep.mubr.f32.mxu0 0.0
  %1171 = vmatmul.mubr.f32.gmra.mrb[0].mxu0 %v1006
  %v1172 = vpop.f32.mrb[0].mxu0
  %v1173 = vadd.f32 0.0, %v1172
  %v1174 = vpop.f32.mrb[0].mxu0
  %v1175 = vadd.f32 0.0, %v1174
  %1176 = vmatprep.mubr.f32.mxu0 0.0
  %1177 = vmatmul.mubr.f32.gmra.mrb[0].mxu0 %v1009
  %v1178 = vpop.f32.mrb[0].mxu0
  %v1179 = vadd.f32 0.0, %v1178
  %v1180 = vpop.f32.mrb[0].mxu0
  %v1181 = vadd.f32 0.0, %v1180
  %1182 = vmatprep.mubr.f32.mxu0 0.0
  %1183 = vmatmul.mubr.f32.gmra.mrb[0].mxu0 %v1012
  %v1184 = vpop.f32.mrb[0].mxu0
  %v1185 = vadd.f32 0.0, %v1184
  %v1186 = vpop.f32.mrb[0].mxu0
  %v1187 = vadd.f32 0.0, %v1186
  %1188 = vmatprep.mubr.f32.mxu0 0.0
  %1189 = vmatmul.mubr.f32.gmra.mrb[0].mxu0 %v1015
  %v1190 = vpop.f32.mrb[0].mxu0
  %v1191 = vadd.f32 0.0, %v1190
  %v1192 = vpop.f32.mrb[0].mxu0
  %v1193 = vadd.f32 0.0, %v1192
  %1194 = vdwg.mxu0
  %v1195 = vadd.f32 %v892, %v1084
  %v1196 = vadd.f32 %v893, %v1086
  %v1197 = vadd.f32 %v894, %v1173
  %v1198 = vadd.f32 %v895, %v1175
  %v1199 = vadd.f32 %v896, %v1090
  %v1200 = vadd.f32 %v897, %v1092
  %v1201 = vadd.f32 %v898, %v1179
  %v1202 = vadd.f32 %v899, %v1181
  %v1203 = vadd.f32 %v900, %v1096
  %v1204 = vadd.f32 %v901, %v1098
  %v1205 = vadd.f32 %v902, %v1185
  %v1206 = vadd.f32 %v903, %v1187
  %v1207 = vadd.f32 %v904, %v1102
  %v1208 = vadd.f32 %v905, %v1104
  %v1209 = vadd.f32 %v906, %v1191
  %v1210 = vadd.f32 %v907, %v1193
  %s1211 = scalar_lea.vmem %s0, 128
  %v1212 = vld [vmem:[%s1211] sm:$0xff]
  %v1213 = vld [vmem:[%s1211 + $0x8] sm:$0xff]
  %v1214 = vld [vmem:[%s1211 + $0x10] sm:$0xff]
  %v1215 = vld [vmem:[%s1211 + $0x18] sm:$0xff]
  %1226 = vrot.lane.b32.xlu0 %v290, 111
  %v1227 = vpop.permute.xlu0 %1226
  %1228 = vrot.lane.b32.xlu0 %v291, 111
  %v1229 = vpop.permute.xlu0 %1228
  %1230 = vrot.lane.b32.xlu0 %v292, 111
  %v1231 = vpop.permute.xlu0 %1230
  %1232 = vrot.lane.b32.xlu0 %v293, 111
  %v1233 = vpop.permute.xlu0 %1232
  %1234 = vrot.lane.b32.xlu0 %v294, 111
  %v1235 = vpop.permute.xlu0 %1234
  %1236 = vrot.lane.b32.xlu0 %v295, 111
  %v1237 = vpop.permute.xlu0 %1236
  %1238 = vrot.lane.b32.xlu0 %v296, 111
  %v1239 = vpop.permute.xlu0 %1238
  %1240 = vrot.lane.b32.xlu0 %v297, 111
  %v1241 = vpop.permute.xlu0 %1240
  %1242 = vrot.lane.b32.xlu0 %v298, 111
  %v1243 = vpop.permute.xlu0 %1242
  %1244 = vrot.lane.b32.xlu0 %v299, 111
  %v1245 = vpop.permute.xlu0 %1244
  %vm1246 = vcmask 908288
  %v1247 = vsel %vm1246, %v1227, %v1229
  %v1248 = vsel %vm1246, %v1229, %v1231
  %v1249 = vsel %vm1246, %v1231, %v1233
  %v1250 = vsel %vm1246, %v1233, %v1235
  %v1251 = vsel %vm1246, %v1237, %v1239
  %v1252 = vsel %vm1246, %v1239, %v1241
  %v1253 = vsel %vm1246, %v1241, %v1243
  %v1254 = vsel %vm1246, %v1243, %v1245
  %v1264 = vsel %vm83, %v1212, 0
  %v1267 = vsel %vm83, %v1213, 0
  %v1270 = vsel %vm83, %v1214, 0
  %v1273 = vsel %vm83, %v1215, 0
  %1275 = vmatprep.subr.mxu0 %v1248
  %1276 = vmatpush1.msra.mxu0 %v1247
  %1277 = vmatprep.subr.mxu0 %v1252
  %1278 = vmatpush1.msra.mxu0 %v1251
  %1279 = vmatprep.subr.mxu0 0.0
  %1280 = vmatpush1.msra.mxu0 0.0
  %1281 = vmatprep.subr.mxu0 0.0
  %1282 = vmatpush1.msra.mxu0 0.0
  %1283 = vmatprep.subr.mxu0 0.0
  %1284 = vmatpush1.msra.mxu0 0.0
  %1285 = vmatprep.subr.mxu0 0.0
  %1286 = vmatpush1.msra.mxu0 0.0
  %1287 = vmatprep.subr.mxu0 0.0
  %1288 = vmatpush1.msra.mxu0 0.0
  %1289 = vmatprep.subr.mxu0 0.0
  %1290 = vmatpush1.msra.mxu0 0.0
  %1291 = vmatprep.subr.mxu0 0.0
  %1292 = vmatpush1.msra.mxu0 0.0
  %1293 = vmatprep.subr.mxu0 0.0
  %1294 = vmatpush1.msra.mxu0 0.0
  %1295 = vmatprep.subr.mxu0 0.0
  %1296 = vmatpush1.msra.mxu0 0.0
  %1297 = vmatprep.subr.mxu0 0.0
  %1298 = vmatpush1.msra.mxu0 0.0
  %1299 = vmatprep.subr.mxu0 0.0
  %1300 = vmatpush1.msra.mxu0 0.0
  %1301 = vmatprep.subr.mxu0 0.0
  %1302 = vmatpush1.msra.mxu0 0.0
  %1303 = vmatprep.subr.mxu0 0.0
  %1304 = vmatpush1.msra.mxu0 0.0
  %1305 = vmatprep.subr.mxu0 0.0
  %1306 = vmatpush1.msra.mxu0 0.0
  %1307 = vmatprep.subr.mxu0 0.0
  %1308 = vmatpush1.msra.mxu0 0.0
  %1309 = vmatprep.subr.mxu0 0.0
  %1310 = vmatpush1.msra.mxu0 0.0
  %1311 = vmatprep.subr.mxu0 0.0
  %1312 = vmatpush1.msra.mxu0 0.0
  %1313 = vmatprep.subr.mxu0 0.0
  %1314 = vmatpush1.msra.mxu0 0.0
  %1315 = vmatprep.subr.mxu0 0.0
  %1316 = vmatpush1.msra.mxu0 0.0
  %1317 = vmatprep.subr.mxu0 0.0
  %1318 = vmatpush1.msra.mxu0 0.0
  %1319 = vmatprep.subr.mxu0 0.0
  %1320 = vmatpush1.msra.mxu0 0.0
  %1321 = vmatprep.subr.mxu0 0.0
  %1322 = vmatpush1.msra.mxu0 0.0
  %1323 = vmatprep.subr.mxu0 0.0
  %1324 = vmatpush1.msra.mxu0 0.0
  %1325 = vmatprep.subr.mxu0 0.0
  %1326 = vmatpush1.msra.mxu0 0.0
  %1327 = vmatprep.subr.mxu0 0.0
  %1328 = vmatpush1.msra.mxu0 0.0
  %1329 = vmatprep.subr.mxu0 0.0
  %1330 = vmatpush1.msra.mxu0 0.0
  %1331 = vmatprep.subr.mxu0 0.0
  %1332 = vmatpush1.msra.mxu0 0.0
  %1333 = vmatprep.subr.mxu0 0.0
  %1334 = vmatpush1.msra.mxu0 0.0
  %1335 = vmatprep.subr.mxu0 0.0
  %1336 = vmatpush1.msra.mxu0 0.0
  %1337 = vmatprep.subr.mxu0 0.0
  %1338 = vmatpush1.msra.mxu0 0.0
  %1339 = vmatprep.mubr.f32.mxu0 0.0
  %1340 = vmatmul.mubr.f32.gmra.mrb[0].mxu0 %v1264
  %v1341 = vpop.f32.mrb[0].mxu0
  %v1342 = vadd.f32 0.0, %v1341
  %v1343 = vpop.f32.mrb[0].mxu0
  %v1344 = vadd.f32 0.0, %v1343
  %1345 = vmatprep.mubr.f32.mxu0 0.0
  %1346 = vmatmul.mubr.f32.gmra.mrb[0].mxu0 %v1267
  %v1347 = vpop.f32.mrb[0].mxu0
  %v1348 = vadd.f32 0.0, %v1347
  %v1349 = vpop.f32.mrb[0].mxu0
  %v1350 = vadd.f32 0.0, %v1349
  %1351 = vmatprep.mubr.f32.mxu0 0.0
  %1352 = vmatmul.mubr.f32.gmra.mrb[0].mxu0 %v1270
  %v1353 = vpop.f32.mrb[0].mxu0
  %v1354 = vadd.f32 0.0, %v1353
  %v1355 = vpop.f32.mrb[0].mxu0
  %v1356 = vadd.f32 0.0, %v1355
  %1357 = vmatprep.mubr.f32.mxu0 0.0
  %1358 = vmatmul.mubr.f32.gmra.mrb[0].mxu0 %v1273
  %v1359 = vpop.f32.mrb[0].mxu0
  %v1360 = vadd.f32 0.0, %v1359
  %v1361 = vpop.f32.mrb[0].mxu0
  %v1362 = vadd.f32 0.0, %v1361
  %1363 = vdwg.mxu0
  %1364 = vmatprep.subr.mxu0 %v1250
  %1365 = vmatpush1.msra.mxu0 %v1249
  %1366 = vmatprep.subr.mxu0 %v1254
  %1367 = vmatpush1.msra.mxu0 %v1253
  %1368 = vmatprep.subr.mxu0 0.0
  %1369 = vmatpush1.msra.mxu0 0.0
  %1370 = vmatprep.subr.mxu0 0.0
  %1371 = vmatpush1.msra.mxu0 0.0
  %1372 = vmatprep.subr.mxu0 0.0
  %1373 = vmatpush1.msra.mxu0 0.0
  %1374 = vmatprep.subr.mxu0 0.0
  %1375 = vmatpush1.msra.mxu0 0.0
  %1376 = vmatprep.subr.mxu0 0.0
  %1377 = vmatpush1.msra.mxu0 0.0
  %1378 = vmatprep.subr.mxu0 0.0
  %1379 = vmatpush1.msra.mxu0 0.0
  %1380 = vmatprep.subr.mxu0 0.0
  %1381 = vmatpush1.msra.mxu0 0.0
  %1382 = vmatprep.subr.mxu0 0.0
  %1383 = vmatpush1.msra.mxu0 0.0
  %1384 = vmatprep.subr.mxu0 0.0
  %1385 = vmatpush1.msra.mxu0 0.0
  %1386 = vmatprep.subr.mxu0 0.0
  %1387 = vmatpush1.msra.mxu0 0.0
  %1388 = vmatprep.subr.mxu0 0.0
  %1389 = vmatpush1.msra.mxu0 0.0
  %1390 = vmatprep.subr.mxu0 0.0
  %1391 = vmatpush1.msra.mxu0 0.0
  %1392 = vmatprep.subr.mxu0 0.0
  %1393 = vmatpush1.msra.mxu0 0.0
  %1394 = vmatprep.subr.mxu0 0.0
  %1395 = vmatpush1.msra.mxu0 0.0
  %1396 = vmatprep.subr.mxu0 0.0
  %1397 = vmatpush1.msra.mxu0 0.0
  %1398 = vmatprep.subr.mxu0 0.0
  %1399 = vmatpush1.msra.mxu0 0.0
  %1400 = vmatprep.subr.mxu0 0.0
  %1401 = vmatpush1.msra.mxu0 0.0
  %1402 = vmatprep.subr.mxu0 0.0
  %1403 = vmatpush1.msra.mxu0 0.0
  %1404 = vmatprep.subr.mxu0 0.0
  %1405 = vmatpush1.msra.mxu0 0.0
  %1406 = vmatprep.subr.mxu0 0.0
  %1407 = vmatpush1.msra.mxu0 0.0
  %1408 = vmatprep.subr.mxu0 0.0
  %1409 = vmatpush1.msra.mxu0 0.0
  %1410 = vmatprep.subr.mxu0 0.0
  %1411 = vmatpush1.msra.mxu0 0.0
  %1412 = vmatprep.subr.mxu0 0.0
  %1413 = vmatpush1.msra.mxu0 0.0
  %1414 = vmatprep.subr.mxu0 0.0
  %1415 = vmatpush1.msra.mxu0 0.0
  %1416 = vmatprep.subr.mxu0 0.0
  %1417 = vmatpush1.msra.mxu0 0.0
  %1418 = vmatprep.subr.mxu0 0.0
  %1419 = vmatpush1.msra.mxu0 0.0
  %1420 = vmatprep.subr.mxu0 0.0
  %1421 = vmatpush1.msra.mxu0 0.0
  %1422 = vmatprep.subr.mxu0 0.0
  %1423 = vmatpush1.msra.mxu0 0.0
  %1424 = vmatprep.subr.mxu0 0.0
  %1425 = vmatpush1.msra.mxu0 0.0
  %1426 = vmatprep.subr.mxu0 0.0
  %1427 = vmatpush1.msra.mxu0 0.0
  %1428 = vmatprep.mubr.f32.mxu0 0.0
  %1429 = vmatmul.mubr.f32.gmra.mrb[0].mxu0 %v1264
  %v1430 = vpop.f32.mrb[0].mxu0
  %v1431 = vadd.f32 0.0, %v1430
  %v1432 = vpop.f32.mrb[0].mxu0
  %v1433 = vadd.f32 0.0, %v1432
  %1434 = vmatprep.mubr.f32.mxu0 0.0
  %1435 = vmatmul.mubr.f32.gmra.mrb[0].mxu0 %v1267
  %v1436 = vpop.f32.mrb[0].mxu0
  %v1437 = vadd.f32 0.0, %v1436
  %v1438 = vpop.f32.mrb[0].mxu0
  %v1439 = vadd.f32 0.0, %v1438
  %1440 = vmatprep.mubr.f32.mxu0 0.0
  %1441 = vmatmul.mubr.f32.gmra.mrb[0].mxu0 %v1270
  %v1442 = vpop.f32.mrb[0].mxu0
  %v1443 = vadd.f32 0.0, %v1442
  %v1444 = vpop.f32.mrb[0].mxu0
  %v1445 = vadd.f32 0.0, %v1444
  %1446 = vmatprep.mubr.f32.mxu0 0.0
  %1447 = vmatmul.mubr.f32.gmra.mrb[0].mxu0 %v1273
  %v1448 = vpop.f32.mrb[0].mxu0
  %v1449 = vadd.f32 0.0, %v1448
  %v1450 = vpop.f32.mrb[0].mxu0
  %v1451 = vadd.f32 0.0, %v1450
  %1452 = vdwg.mxu0
  %v1453 = vadd.f32 %v1195, %v1342
  %v1454 = vadd.f32 %v1196, %v1344
  %v1455 = vadd.f32 %v1197, %v1431
  %v1456 = vadd.f32 %v1198, %v1433
  %v1457 = vadd.f32 %v1199, %v1348
  %v1458 = vadd.f32 %v1200, %v1350
  %v1459 = vadd.f32 %v1201, %v1437
  %v1460 = vadd.f32 %v1202, %v1439
  %v1461 = vadd.f32 %v1203, %v1354
  %v1462 = vadd.f32 %v1204, %v1356
  %v1463 = vadd.f32 %v1205, %v1443
  %v1464 = vadd.f32 %v1206, %v1445
  %v1465 = vadd.f32 %v1207, %v1360
  %v1466 = vadd.f32 %v1208, %v1362
  %v1467 = vadd.f32 %v1209, %v1449
  %v1468 = vadd.f32 %v1210, %v1451
  %s1469 = scalar_lea.vmem %s2, 20
  %v1470 = vld [vmem:[%s1469] sm:$0xf]
  %v1472 = vlaneseq
  %v1473 = vshrl.u32 %v1472, 7
  %v1474 = vsub.s32 0, %v1473
  %v1475 = vrot.slane %v1470, %v1474
  %v1476 = vlaneseq
  %v1477 = vshrl.u32 %v1476, 7
  %v1478 = vsub.s32 1, %v1477
  %v1479 = vrot.slane %v1470, %v1478
  %v1480 = vlaneseq
  %v1481 = vshrl.u32 %v1480, 7
  %v1482 = vsub.s32 2, %v1481
  %v1483 = vrot.slane %v1470, %v1482
  %v1484 = vlaneseq
  %v1485 = vshrl.u32 %v1484, 7
  %v1486 = vsub.s32 3, %v1485
  %v1487 = vrot.slane %v1470, %v1486
  %1488 = vrot.lane.b32.xlu0 %v1475, 18
  %v1489 = vpop.permute.xlu0 %1488
  %1490 = vrot.lane.b32.xlu0 %v1479, 18
  %v1491 = vpop.permute.xlu0 %1490
  %1492 = vrot.lane.b32.xlu0 %v1483, 18
  %v1493 = vpop.permute.xlu0 %1492
  %1494 = vrot.lane.b32.xlu0 %v1487, 18
  %v1495 = vpop.permute.xlu0 %1494
  %vm1496 = vcmask 146432
  %v1497 = vsel %vm1496, %v1489, %v1491
  %v1498 = vsel %vm1496, %v1491, %v1493
  %v1499 = vsel %vm1496, %v1493, %v1495
  %v1505 = vmul.f32 %v290, %v1489
  %v1506 = vmul.f32 %v291, %v1497
  %v1507 = vmul.f32 %v292, %v1498
  %v1508 = vmul.f32 %v293, %v1499
  %v1509 = vmul.f32 %v294, %v1495
  %v1510 = vmul.f32 %v295, %v1489
  %v1511 = vmul.f32 %v296, %v1497
  %v1512 = vmul.f32 %v297, %v1498
  %v1513 = vmul.f32 %v298, %v1499
  %v1514 = vmul.f32 %v299, %v1495
  %s1515 = scalar_lea.vmem %s0, 160
  %v1516 = vld [vmem:[%s1515] sm:$0xff]
  %v1517 = vld [vmem:[%s1515 + $0x8] sm:$0xff]
  %v1518 = vld [vmem:[%s1515 + $0x10] sm:$0xff]
  %v1519 = vld [vmem:[%s1515 + $0x18] sm:$0xff]
  %1530 = vrot.lane.b32.xlu0 %v1505, 110
  %v1531 = vpop.permute.xlu0 %1530
  %1532 = vrot.lane.b32.xlu0 %v1506, 110
  %v1533 = vpop.permute.xlu0 %1532
  %1534 = vrot.lane.b32.xlu0 %v1507, 110
  %v1535 = vpop.permute.xlu0 %1534
  %1536 = vrot.lane.b32.xlu0 %v1508, 110
  %v1537 = vpop.permute.xlu0 %1536
  %1538 = vrot.lane.b32.xlu0 %v1509, 110
  %v1539 = vpop.permute.xlu0 %1538
  %1540 = vrot.lane.b32.xlu0 %v1510, 110
  %v1541 = vpop.permute.xlu0 %1540
  %1542 = vrot.lane.b32.xlu0 %v1511, 110
  %v1543 = vpop.permute.xlu0 %1542
  %1544 = vrot.lane.b32.xlu0 %v1512, 110
  %v1545 = vpop.permute.xlu0 %1544
  %1546 = vrot.lane.b32.xlu0 %v1513, 110
  %v1547 = vpop.permute.xlu0 %1546
  %1548 = vrot.lane.b32.xlu0 %v1514, 110
  %v1549 = vpop.permute.xlu0 %1548
  %vm1550 = vcmask 900096
  %v1551 = vsel %vm1550, %v1531, %v1533
  %v1552 = vsel %vm1550, %v1533, %v1535
  %v1553 = vsel %vm1550, %v1535, %v1537
  %v1554 = vsel %vm1550, %v1537, %v1539
  %v1555 = vsel %vm1550, %v1541, %v1543
  %v1556 = vsel %vm1550, %v1543, %v1545
  %v1557 = vsel %vm1550, %v1545, %v1547
  %v1558 = vsel %vm1550, %v1547, %v1549
  %v1568 = vsel %vm83, %v1516, 0
  %v1571 = vsel %vm83, %v1517, 0
  %v1574 = vsel %vm83, %v1518, 0
  %v1577 = vsel %vm83, %v1519, 0
  %1579 = vmatprep.subr.mxu0 %v1552
  %1580 = vmatpush1.msra.mxu0 %v1551
  %1581 = vmatprep.subr.mxu0 %v1556
  %1582 = vmatpush1.msra.mxu0 %v1555
  %1583 = vmatprep.subr.mxu0 0.0
  %1584 = vmatpush1.msra.mxu0 0.0
  %1585 = vmatprep.subr.mxu0 0.0
  %1586 = vmatpush1.msra.mxu0 0.0
  %1587 = vmatprep.subr.mxu0 0.0
  %1588 = vmatpush1.msra.mxu0 0.0
  %1589 = vmatprep.subr.mxu0 0.0
  %1590 = vmatpush1.msra.mxu0 0.0
  %1591 = vmatprep.subr.mxu0 0.0
  %1592 = vmatpush1.msra.mxu0 0.0
  %1593 = vmatprep.subr.mxu0 0.0
  %1594 = vmatpush1.msra.mxu0 0.0
  %1595 = vmatprep.subr.mxu0 0.0
  %1596 = vmatpush1.msra.mxu0 0.0
  %1597 = vmatprep.subr.mxu0 0.0
  %1598 = vmatpush1.msra.mxu0 0.0
  %1599 = vmatprep.subr.mxu0 0.0
  %1600 = vmatpush1.msra.mxu0 0.0
  %1601 = vmatprep.subr.mxu0 0.0
  %1602 = vmatpush1.msra.mxu0 0.0
  %1603 = vmatprep.subr.mxu0 0.0
  %1604 = vmatpush1.msra.mxu0 0.0
  %1605 = vmatprep.subr.mxu0 0.0
  %1606 = vmatpush1.msra.mxu0 0.0
  %1607 = vmatprep.subr.mxu0 0.0
  %1608 = vmatpush1.msra.mxu0 0.0
  %1609 = vmatprep.subr.mxu0 0.0
  %1610 = vmatpush1.msra.mxu0 0.0
  %1611 = vmatprep.subr.mxu0 0.0
  %1612 = vmatpush1.msra.mxu0 0.0
  %1613 = vmatprep.subr.mxu0 0.0
  %1614 = vmatpush1.msra.mxu0 0.0
  %1615 = vmatprep.subr.mxu0 0.0
  %1616 = vmatpush1.msra.mxu0 0.0
  %1617 = vmatprep.subr.mxu0 0.0
  %1618 = vmatpush1.msra.mxu0 0.0
  %1619 = vmatprep.subr.mxu0 0.0
  %1620 = vmatpush1.msra.mxu0 0.0
  %1621 = vmatprep.subr.mxu0 0.0
  %1622 = vmatpush1.msra.mxu0 0.0
  %1623 = vmatprep.subr.mxu0 0.0
  %1624 = vmatpush1.msra.mxu0 0.0
  %1625 = vmatprep.subr.mxu0 0.0
  %1626 = vmatpush1.msra.mxu0 0.0
  %1627 = vmatprep.subr.mxu0 0.0
  %1628 = vmatpush1.msra.mxu0 0.0
  %1629 = vmatprep.subr.mxu0 0.0
  %1630 = vmatpush1.msra.mxu0 0.0
  %1631 = vmatprep.subr.mxu0 0.0
  %1632 = vmatpush1.msra.mxu0 0.0
  %1633 = vmatprep.subr.mxu0 0.0
  %1634 = vmatpush1.msra.mxu0 0.0
  %1635 = vmatprep.subr.mxu0 0.0
  %1636 = vmatpush1.msra.mxu0 0.0
  %1637 = vmatprep.subr.mxu0 0.0
  %1638 = vmatpush1.msra.mxu0 0.0
  %1639 = vmatprep.subr.mxu0 0.0
  %1640 = vmatpush1.msra.mxu0 0.0
  %1641 = vmatprep.subr.mxu0 0.0
  %1642 = vmatpush1.msra.mxu0 0.0
  %1643 = vmatprep.mubr.f32.mxu0 0.0
  %1644 = vmatmul.mubr.f32.gmra.mrb[0].mxu0 %v1568
  %v1645 = vpop.f32.mrb[0].mxu0
  %v1646 = vadd.f32 0.0, %v1645
  %v1647 = vpop.f32.mrb[0].mxu0
  %v1648 = vadd.f32 0.0, %v1647
  %1649 = vmatprep.mubr.f32.mxu0 0.0
  %1650 = vmatmul.mubr.f32.gmra.mrb[0].mxu0 %v1571
  %v1651 = vpop.f32.mrb[0].mxu0
  %v1652 = vadd.f32 0.0, %v1651
  %v1653 = vpop.f32.mrb[0].mxu0
  %v1654 = vadd.f32 0.0, %v1653
  %1655 = vmatprep.mubr.f32.mxu0 0.0
  %1656 = vmatmul.mubr.f32.gmra.mrb[0].mxu0 %v1574
  %v1657 = vpop.f32.mrb[0].mxu0
  %v1658 = vadd.f32 0.0, %v1657
  %v1659 = vpop.f32.mrb[0].mxu0
  %v1660 = vadd.f32 0.0, %v1659
  %1661 = vmatprep.mubr.f32.mxu0 0.0
  %1662 = vmatmul.mubr.f32.gmra.mrb[0].mxu0 %v1577
  %v1663 = vpop.f32.mrb[0].mxu0
  %v1664 = vadd.f32 0.0, %v1663
  %v1665 = vpop.f32.mrb[0].mxu0
  %v1666 = vadd.f32 0.0, %v1665
  %1667 = vdwg.mxu0
  %1668 = vmatprep.subr.mxu0 %v1554
  %1669 = vmatpush1.msra.mxu0 %v1553
  %1670 = vmatprep.subr.mxu0 %v1558
  %1671 = vmatpush1.msra.mxu0 %v1557
  %1672 = vmatprep.subr.mxu0 0.0
  %1673 = vmatpush1.msra.mxu0 0.0
  %1674 = vmatprep.subr.mxu0 0.0
  %1675 = vmatpush1.msra.mxu0 0.0
  %1676 = vmatprep.subr.mxu0 0.0
  %1677 = vmatpush1.msra.mxu0 0.0
  %1678 = vmatprep.subr.mxu0 0.0
  %1679 = vmatpush1.msra.mxu0 0.0
  %1680 = vmatprep.subr.mxu0 0.0
  %1681 = vmatpush1.msra.mxu0 0.0
  %1682 = vmatprep.subr.mxu0 0.0
  %1683 = vmatpush1.msra.mxu0 0.0
  %1684 = vmatprep.subr.mxu0 0.0
  %1685 = vmatpush1.msra.mxu0 0.0
  %1686 = vmatprep.subr.mxu0 0.0
  %1687 = vmatpush1.msra.mxu0 0.0
  %1688 = vmatprep.subr.mxu0 0.0
  %1689 = vmatpush1.msra.mxu0 0.0
  %1690 = vmatprep.subr.mxu0 0.0
  %1691 = vmatpush1.msra.mxu0 0.0
  %1692 = vmatprep.subr.mxu0 0.0
  %1693 = vmatpush1.msra.mxu0 0.0
  %1694 = vmatprep.subr.mxu0 0.0
  %1695 = vmatpush1.msra.mxu0 0.0
  %1696 = vmatprep.subr.mxu0 0.0
  %1697 = vmatpush1.msra.mxu0 0.0
  %1698 = vmatprep.subr.mxu0 0.0
  %1699 = vmatpush1.msra.mxu0 0.0
  %1700 = vmatprep.subr.mxu0 0.0
  %1701 = vmatpush1.msra.mxu0 0.0
  %1702 = vmatprep.subr.mxu0 0.0
  %1703 = vmatpush1.msra.mxu0 0.0
  %1704 = vmatprep.subr.mxu0 0.0
  %1705 = vmatpush1.msra.mxu0 0.0
  %1706 = vmatprep.subr.mxu0 0.0
  %1707 = vmatpush1.msra.mxu0 0.0
  %1708 = vmatprep.subr.mxu0 0.0
  %1709 = vmatpush1.msra.mxu0 0.0
  %1710 = vmatprep.subr.mxu0 0.0
  %1711 = vmatpush1.msra.mxu0 0.0
  %1712 = vmatprep.subr.mxu0 0.0
  %1713 = vmatpush1.msra.mxu0 0.0
  %1714 = vmatprep.subr.mxu0 0.0
  %1715 = vmatpush1.msra.mxu0 0.0
  %1716 = vmatprep.subr.mxu0 0.0
  %1717 = vmatpush1.msra.mxu0 0.0
  %1718 = vmatprep.subr.mxu0 0.0
  %1719 = vmatpush1.msra.mxu0 0.0
  %1720 = vmatprep.subr.mxu0 0.0
  %1721 = vmatpush1.msra.mxu0 0.0
  %1722 = vmatprep.subr.mxu0 0.0
  %1723 = vmatpush1.msra.mxu0 0.0
  %1724 = vmatprep.subr.mxu0 0.0
  %1725 = vmatpush1.msra.mxu0 0.0
  %1726 = vmatprep.subr.mxu0 0.0
  %1727 = vmatpush1.msra.mxu0 0.0
  %1728 = vmatprep.subr.mxu0 0.0
  %1729 = vmatpush1.msra.mxu0 0.0
  %1730 = vmatprep.subr.mxu0 0.0
  %1731 = vmatpush1.msra.mxu0 0.0
  %1732 = vmatprep.mubr.f32.mxu0 0.0
  %1733 = vmatmul.mubr.f32.gmra.mrb[0].mxu0 %v1568
  %v1734 = vpop.f32.mrb[0].mxu0
  %v1735 = vadd.f32 0.0, %v1734
  %v1736 = vpop.f32.mrb[0].mxu0
  %v1737 = vadd.f32 0.0, %v1736
  %1738 = vmatprep.mubr.f32.mxu0 0.0
  %1739 = vmatmul.mubr.f32.gmra.mrb[0].mxu0 %v1571
  %v1740 = vpop.f32.mrb[0].mxu0
  %v1741 = vadd.f32 0.0, %v1740
  %v1742 = vpop.f32.mrb[0].mxu0
  %v1743 = vadd.f32 0.0, %v1742
  %1744 = vmatprep.mubr.f32.mxu0 0.0
  %1745 = vmatmul.mubr.f32.gmra.mrb[0].mxu0 %v1574
  %v1746 = vpop.f32.mrb[0].mxu0
  %v1747 = vadd.f32 0.0, %v1746
  %v1748 = vpop.f32.mrb[0].mxu0
  %v1749 = vadd.f32 0.0, %v1748
  %1750 = vmatprep.mubr.f32.mxu0 0.0
  %1751 = vmatmul.mubr.f32.gmra.mrb[0].mxu0 %v1577
  %v1752 = vpop.f32.mrb[0].mxu0
  %v1753 = vadd.f32 0.0, %v1752
  %v1754 = vpop.f32.mrb[0].mxu0
  %v1755 = vadd.f32 0.0, %v1754
  %1756 = vdwg.mxu0
  %v1757 = vadd.f32 %v1453, %v1646
  %v1758 = vadd.f32 %v1454, %v1648
  %v1759 = vadd.f32 %v1455, %v1735
  %v1760 = vadd.f32 %v1456, %v1737
  %v1761 = vadd.f32 %v1457, %v1652
  %v1762 = vadd.f32 %v1458, %v1654
  %v1763 = vadd.f32 %v1459, %v1741
  %v1764 = vadd.f32 %v1460, %v1743
  %v1765 = vadd.f32 %v1461, %v1658
  %v1766 = vadd.f32 %v1462, %v1660
  %v1767 = vadd.f32 %v1463, %v1747
  %v1768 = vadd.f32 %v1464, %v1749
  %v1769 = vadd.f32 %v1465, %v1664
  %v1770 = vadd.f32 %v1466, %v1666
  %v1771 = vadd.f32 %v1467, %v1753
  %v1772 = vadd.f32 %v1468, %v1755
  %s1773 = scalar_lea.vmem %s2, 24
  %v1774 = vld [vmem:[%s1773] sm:$0xf]
  %v1776 = vlaneseq
  %v1777 = vshrl.u32 %v1776, 7
  %v1778 = vsub.s32 0, %v1777
  %v1779 = vrot.slane %v1774, %v1778
  %v1780 = vlaneseq
  %v1781 = vshrl.u32 %v1780, 7
  %v1782 = vsub.s32 1, %v1781
  %v1783 = vrot.slane %v1774, %v1782
  %v1784 = vlaneseq
  %v1785 = vshrl.u32 %v1784, 7
  %v1786 = vsub.s32 2, %v1785
  %v1787 = vrot.slane %v1774, %v1786
  %v1788 = vlaneseq
  %v1789 = vshrl.u32 %v1788, 7
  %v1790 = vsub.s32 3, %v1789
  %v1791 = vrot.slane %v1774, %v1790
  %1792 = vrot.lane.b32.xlu0 %v1779, 32
  %v1793 = vpop.permute.xlu0 %1792
  %1794 = vrot.lane.b32.xlu0 %v1783, 32
  %v1795 = vpop.permute.xlu0 %1794
  %1796 = vrot.lane.b32.xlu0 %v1787, 32
  %v1797 = vpop.permute.xlu0 %1796
  %1798 = vrot.lane.b32.xlu0 %v1791, 32
  %v1799 = vpop.permute.xlu0 %1798
  %vm1800 = vcmask 261120
  %v1801 = vsel %vm1800, %v1793, %v1795
  %v1802 = vsel %vm1800, %v1795, %v1797
  %v1803 = vsel %vm1800, %v1797, %v1799
  %v1809 = vmul.f32 %v290, %v1793
  %v1810 = vmul.f32 %v291, %v1801
  %v1811 = vmul.f32 %v292, %v1802
  %v1812 = vmul.f32 %v293, %v1803
  %v1813 = vmul.f32 %v294, %v1799
  %v1814 = vmul.f32 %v295, %v1793
  %v1815 = vmul.f32 %v296, %v1801
  %v1816 = vmul.f32 %v297, %v1802
  %v1817 = vmul.f32 %v298, %v1803
  %v1818 = vmul.f32 %v299, %v1799
  %s1819 = scalar_lea.vmem %s0, 192
  %v1820 = vld [vmem:[%s1819] sm:$0xff]
  %v1821 = vld [vmem:[%s1819 + $0x8] sm:$0xff]
  %v1822 = vld [vmem:[%s1819 + $0x10] sm:$0xff]
  %v1823 = vld [vmem:[%s1819 + $0x18] sm:$0xff]
  %1834 = vrot.lane.b32.xlu0 %v1809, 96
  %v1835 = vpop.permute.xlu0 %1834
  %1836 = vrot.lane.b32.xlu0 %v1810, 96
  %v1837 = vpop.permute.xlu0 %1836
  %1838 = vrot.lane.b32.xlu0 %v1811, 96
  %v1839 = vpop.permute.xlu0 %1838
  %1840 = vrot.lane.b32.xlu0 %v1812, 96
  %v1841 = vpop.permute.xlu0 %1840
  %1842 = vrot.lane.b32.xlu0 %v1813, 96
  %v1843 = vpop.permute.xlu0 %1842
  %1844 = vrot.lane.b32.xlu0 %v1814, 96
  %v1845 = vpop.permute.xlu0 %1844
  %1846 = vrot.lane.b32.xlu0 %v1815, 96
  %v1847 = vpop.permute.xlu0 %1846
  %1848 = vrot.lane.b32.xlu0 %v1816, 96
  %v1849 = vpop.permute.xlu0 %1848
  %1850 = vrot.lane.b32.xlu0 %v1817, 96
  %v1851 = vpop.permute.xlu0 %1850
  %1852 = vrot.lane.b32.xlu0 %v1818, 96
  %v1853 = vpop.permute.xlu0 %1852
  %vm1854 = vcmask 785408
  %v1855 = vsel %vm1854, %v1835, %v1837
  %v1856 = vsel %vm1854, %v1837, %v1839
  %v1857 = vsel %vm1854, %v1839, %v1841
  %v1858 = vsel %vm1854, %v1841, %v1843
  %v1859 = vsel %vm1854, %v1845, %v1847
  %v1860 = vsel %vm1854, %v1847, %v1849
  %v1861 = vsel %vm1854, %v1849, %v1851
  %v1862 = vsel %vm1854, %v1851, %v1853
  %v1872 = vsel %vm83, %v1820, 0
  %v1875 = vsel %vm83, %v1821, 0
  %v1878 = vsel %vm83, %v1822, 0
  %v1881 = vsel %vm83, %v1823, 0
  %1883 = vmatprep.subr.mxu0 %v1856
  %1884 = vmatpush1.msra.mxu0 %v1855
  %1885 = vmatprep.subr.mxu0 %v1860
  %1886 = vmatpush1.msra.mxu0 %v1859
  %1887 = vmatprep.subr.mxu0 0.0
  %1888 = vmatpush1.msra.mxu0 0.0
  %1889 = vmatprep.subr.mxu0 0.0
  %1890 = vmatpush1.msra.mxu0 0.0
  %1891 = vmatprep.subr.mxu0 0.0
  %1892 = vmatpush1.msra.mxu0 0.0
  %1893 = vmatprep.subr.mxu0 0.0
  %1894 = vmatpush1.msra.mxu0 0.0
  %1895 = vmatprep.subr.mxu0 0.0
  %1896 = vmatpush1.msra.mxu0 0.0
  %1897 = vmatprep.subr.mxu0 0.0
  %1898 = vmatpush1.msra.mxu0 0.0
  %1899 = vmatprep.subr.mxu0 0.0
  %1900 = vmatpush1.msra.mxu0 0.0
  %1901 = vmatprep.subr.mxu0 0.0
  %1902 = vmatpush1.msra.mxu0 0.0
  %1903 = vmatprep.subr.mxu0 0.0
  %1904 = vmatpush1.msra.mxu0 0.0
  %1905 = vmatprep.subr.mxu0 0.0
  %1906 = vmatpush1.msra.mxu0 0.0
  %1907 = vmatprep.subr.mxu0 0.0
  %1908 = vmatpush1.msra.mxu0 0.0
  %1909 = vmatprep.subr.mxu0 0.0
  %1910 = vmatpush1.msra.mxu0 0.0
  %1911 = vmatprep.subr.mxu0 0.0
  %1912 = vmatpush1.msra.mxu0 0.0
  %1913 = vmatprep.subr.mxu0 0.0
  %1914 = vmatpush1.msra.mxu0 0.0
  %1915 = vmatprep.subr.mxu0 0.0
  %1916 = vmatpush1.msra.mxu0 0.0
  %1917 = vmatprep.subr.mxu0 0.0
  %1918 = vmatpush1.msra.mxu0 0.0
  %1919 = vmatprep.subr.mxu0 0.0
  %1920 = vmatpush1.msra.mxu0 0.0
  %1921 = vmatprep.subr.mxu0 0.0
  %1922 = vmatpush1.msra.mxu0 0.0
  %1923 = vmatprep.subr.mxu0 0.0
  %1924 = vmatpush1.msra.mxu0 0.0
  %1925 = vmatprep.subr.mxu0 0.0
  %1926 = vmatpush1.msra.mxu0 0.0
  %1927 = vmatprep.subr.mxu0 0.0
  %1928 = vmatpush1.msra.mxu0 0.0
  %1929 = vmatprep.subr.mxu0 0.0
  %1930 = vmatpush1.msra.mxu0 0.0
  %1931 = vmatprep.subr.mxu0 0.0
  %1932 = vmatpush1.msra.mxu0 0.0
  %1933 = vmatprep.subr.mxu0 0.0
  %1934 = vmatpush1.msra.mxu0 0.0
  %1935 = vmatprep.subr.mxu0 0.0
  %1936 = vmatpush1.msra.mxu0 0.0
  %1937 = vmatprep.subr.mxu0 0.0
  %1938 = vmatpush1.msra.mxu0 0.0
  %1939 = vmatprep.subr.mxu0 0.0
  %1940 = vmatpush1.msra.mxu0 0.0
  %1941 = vmatprep.subr.mxu0 0.0
  %1942 = vmatpush1.msra.mxu0 0.0
  %1943 = vmatprep.subr.mxu0 0.0
  %1944 = vmatpush1.msra.mxu0 0.0
  %1945 = vmatprep.subr.mxu0 0.0
  %1946 = vmatpush1.msra.mxu0 0.0
  %1947 = vmatprep.mubr.f32.mxu0 0.0
  %1948 = vmatmul.mubr.f32.gmra.mrb[0].mxu0 %v1872
  %v1949 = vpop.f32.mrb[0].mxu0
  %v1950 = vadd.f32 0.0, %v1949
  %v1951 = vpop.f32.mrb[0].mxu0
  %v1952 = vadd.f32 0.0, %v1951
  %1953 = vmatprep.mubr.f32.mxu0 0.0
  %1954 = vmatmul.mubr.f32.gmra.mrb[0].mxu0 %v1875
  %v1955 = vpop.f32.mrb[0].mxu0
  %v1956 = vadd.f32 0.0, %v1955
  %v1957 = vpop.f32.mrb[0].mxu0
  %v1958 = vadd.f32 0.0, %v1957
  %1959 = vmatprep.mubr.f32.mxu0 0.0
  %1960 = vmatmul.mubr.f32.gmra.mrb[0].mxu0 %v1878
  %v1961 = vpop.f32.mrb[0].mxu0
  %v1962 = vadd.f32 0.0, %v1961
  %v1963 = vpop.f32.mrb[0].mxu0
  %v1964 = vadd.f32 0.0, %v1963
  %1965 = vmatprep.mubr.f32.mxu0 0.0
  %1966 = vmatmul.mubr.f32.gmra.mrb[0].mxu0 %v1881
  %v1967 = vpop.f32.mrb[0].mxu0
  %v1968 = vadd.f32 0.0, %v1967
  %v1969 = vpop.f32.mrb[0].mxu0
  %v1970 = vadd.f32 0.0, %v1969
  %1971 = vdwg.mxu0
  %1972 = vmatprep.subr.mxu0 %v1858
  %1973 = vmatpush1.msra.mxu0 %v1857
  %1974 = vmatprep.subr.mxu0 %v1862
  %1975 = vmatpush1.msra.mxu0 %v1861
  %1976 = vmatprep.subr.mxu0 0.0
  %1977 = vmatpush1.msra.mxu0 0.0
  %1978 = vmatprep.subr.mxu0 0.0
  %1979 = vmatpush1.msra.mxu0 0.0
  %1980 = vmatprep.subr.mxu0 0.0
  %1981 = vmatpush1.msra.mxu0 0.0
  %1982 = vmatprep.subr.mxu0 0.0
  %1983 = vmatpush1.msra.mxu0 0.0
  %1984 = vmatprep.subr.mxu0 0.0
  %1985 = vmatpush1.msra.mxu0 0.0
  %1986 = vmatprep.subr.mxu0 0.0
  %1987 = vmatpush1.msra.mxu0 0.0
  %1988 = vmatprep.subr.mxu0 0.0
  %1989 = vmatpush1.msra.mxu0 0.0
  %1990 = vmatprep.subr.mxu0 0.0
  %1991 = vmatpush1.msra.mxu0 0.0
  %1992 = vmatprep.subr.mxu0 0.0
  %1993 = vmatpush1.msra.mxu0 0.0
  %1994 = vmatprep.subr.mxu0 0.0
  %1995 = vmatpush1.msra.mxu0 0.0
  %1996 = vmatprep.subr.mxu0 0.0
  %1997 = vmatpush1.msra.mxu0 0.0
  %1998 = vmatprep.subr.mxu0 0.0
  %1999 = vmatpush1.msra.mxu0 0.0
  %2000 = vmatprep.subr.mxu0 0.0
  %2001 = vmatpush1.msra.mxu0 0.0
  %2002 = vmatprep.subr.mxu0 0.0
  %2003 = vmatpush1.msra.mxu0 0.0
  %2004 = vmatprep.subr.mxu0 0.0
  %2005 = vmatpush1.msra.mxu0 0.0
  %2006 = vmatprep.subr.mxu0 0.0
  %2007 = vmatpush1.msra.mxu0 0.0
  %2008 = vmatprep.subr.mxu0 0.0
  %2009 = vmatpush1.msra.mxu0 0.0
  %2010 = vmatprep.subr.mxu0 0.0
  %2011 = vmatpush1.msra.mxu0 0.0
  %2012 = vmatprep.subr.mxu0 0.0
  %2013 = vmatpush1.msra.mxu0 0.0
  %2014 = vmatprep.subr.mxu0 0.0
  %2015 = vmatpush1.msra.mxu0 0.0
  %2016 = vmatprep.subr.mxu0 0.0
  %2017 = vmatpush1.msra.mxu0 0.0
  %2018 = vmatprep.subr.mxu0 0.0
  %2019 = vmatpush1.msra.mxu0 0.0
  %2020 = vmatprep.subr.mxu0 0.0
  %2021 = vmatpush1.msra.mxu0 0.0
  %2022 = vmatprep.subr.mxu0 0.0
  %2023 = vmatpush1.msra.mxu0 0.0
  %2024 = vmatprep.subr.mxu0 0.0
  %2025 = vmatpush1.msra.mxu0 0.0
  %2026 = vmatprep.subr.mxu0 0.0
  %2027 = vmatpush1.msra.mxu0 0.0
  %2028 = vmatprep.subr.mxu0 0.0
  %2029 = vmatpush1.msra.mxu0 0.0
  %2030 = vmatprep.subr.mxu0 0.0
  %2031 = vmatpush1.msra.mxu0 0.0
  %2032 = vmatprep.subr.mxu0 0.0
  %2033 = vmatpush1.msra.mxu0 0.0
  %2034 = vmatprep.subr.mxu0 0.0
  %2035 = vmatpush1.msra.mxu0 0.0
  %2036 = vmatprep.mubr.f32.mxu0 0.0
  %2037 = vmatmul.mubr.f32.gmra.mrb[0].mxu0 %v1872
  %v2038 = vpop.f32.mrb[0].mxu0
  %v2039 = vadd.f32 0.0, %v2038
  %v2040 = vpop.f32.mrb[0].mxu0
  %v2041 = vadd.f32 0.0, %v2040
  %2042 = vmatprep.mubr.f32.mxu0 0.0
  %2043 = vmatmul.mubr.f32.gmra.mrb[0].mxu0 %v1875
  %v2044 = vpop.f32.mrb[0].mxu0
  %v2045 = vadd.f32 0.0, %v2044
  %v2046 = vpop.f32.mrb[0].mxu0
  %v2047 = vadd.f32 0.0, %v2046
  %2048 = vmatprep.mubr.f32.mxu0 0.0
  %2049 = vmatmul.mubr.f32.gmra.mrb[0].mxu0 %v1878
  %v2050 = vpop.f32.mrb[0].mxu0
  %v2051 = vadd.f32 0.0, %v2050
  %v2052 = vpop.f32.mrb[0].mxu0
  %v2053 = vadd.f32 0.0, %v2052
  %2054 = vmatprep.mubr.f32.mxu0 0.0
  %2055 = vmatmul.mubr.f32.gmra.mrb[0].mxu0 %v1881
  %v2056 = vpop.f32.mrb[0].mxu0
  %v2057 = vadd.f32 0.0, %v2056
  %v2058 = vpop.f32.mrb[0].mxu0
  %v2059 = vadd.f32 0.0, %v2058
  %2060 = vdwg.mxu0
  %v2061 = vadd.f32 %v1757, %v1950
  %v2062 = vadd.f32 %v1758, %v1952
  %v2063 = vadd.f32 %v1759, %v2039
  %v2064 = vadd.f32 %v1760, %v2041
  %v2065 = vadd.f32 %v1761, %v1956
  %v2066 = vadd.f32 %v1762, %v1958
  %v2067 = vadd.f32 %v1763, %v2045
  %v2068 = vadd.f32 %v1764, %v2047
  %v2069 = vadd.f32 %v1765, %v1962
  %v2070 = vadd.f32 %v1766, %v1964
  %v2071 = vadd.f32 %v1767, %v2051
  %v2072 = vadd.f32 %v1768, %v2053
  %v2073 = vadd.f32 %v1769, %v1968
  %v2074 = vadd.f32 %v1770, %v1970
  %v2075 = vadd.f32 %v1771, %v2057
  %v2076 = vadd.f32 %v1772, %v2059
  %s2077 = scalar_lea.vmem %s2, 28
  %v2078 = vld [vmem:[%s2077] sm:$0xf]
  %v2080 = vlaneseq
  %v2081 = vshrl.u32 %v2080, 7
  %v2082 = vsub.s32 0, %v2081
  %v2083 = vrot.slane %v2078, %v2082
  %v2084 = vlaneseq
  %v2085 = vshrl.u32 %v2084, 7
  %v2086 = vsub.s32 1, %v2085
  %v2087 = vrot.slane %v2078, %v2086
  %v2088 = vlaneseq
  %v2089 = vshrl.u32 %v2088, 7
  %v2090 = vsub.s32 2, %v2089
  %v2091 = vrot.slane %v2078, %v2090
  %v2092 = vlaneseq
  %v2093 = vshrl.u32 %v2092, 7
  %v2094 = vsub.s32 3, %v2093
  %v2095 = vrot.slane %v2078, %v2094
  %2096 = vrot.lane.b32.xlu0 %v2083, 33
  %v2097 = vpop.permute.xlu0 %2096
  %2098 = vrot.lane.b32.xlu0 %v2087, 33
  %v2099 = vpop.permute.xlu0 %2098
  %2100 = vrot.lane.b32.xlu0 %v2091, 33
  %v2101 = vpop.permute.xlu0 %2100
  %2102 = vrot.lane.b32.xlu0 %v2095, 33
  %v2103 = vpop.permute.xlu0 %2102
  %vm2104 = vcmask 269312
  %v2105 = vsel %vm2104, %v2097, %v2099
  %v2106 = vsel %vm2104, %v2099, %v2101
  %v2107 = vsel %vm2104, %v2101, %v2103
  %v2113 = vmul.f32 %v290, %v2097
  %v2114 = vmul.f32 %v291, %v2105
  %v2115 = vmul.f32 %v292, %v2106
  %v2116 = vmul.f32 %v293, %v2107
  %v2117 = vmul.f32 %v294, %v2103
  %v2118 = vmul.f32 %v295, %v2097
  %v2119 = vmul.f32 %v296, %v2105
  %v2120 = vmul.f32 %v297, %v2106
  %v2121 = vmul.f32 %v298, %v2107
  %v2122 = vmul.f32 %v299, %v2103
  %s2123 = scalar_lea.vmem %s0, 224
  %v2124 = vld [vmem:[%s2123] sm:$0xff]
  %v2125 = vld [vmem:[%s2123 + $0x8] sm:$0xff]
  %v2126 = vld [vmem:[%s2123 + $0x10] sm:$0xff]
  %v2127 = vld [vmem:[%s2123 + $0x18] sm:$0xff]
  %2138 = vrot.lane.b32.xlu0 %v2113, 95
  %v2139 = vpop.permute.xlu0 %2138
  %2140 = vrot.lane.b32.xlu0 %v2114, 95
  %v2141 = vpop.permute.xlu0 %2140
  %2142 = vrot.lane.b32.xlu0 %v2115, 95
  %v2143 = vpop.permute.xlu0 %2142
  %2144 = vrot.lane.b32.xlu0 %v2116, 95
  %v2145 = vpop.permute.xlu0 %2144
  %2146 = vrot.lane.b32.xlu0 %v2117, 95
  %v2147 = vpop.permute.xlu0 %2146
  %2148 = vrot.lane.b32.xlu0 %v2118, 95
  %v2149 = vpop.permute.xlu0 %2148
  %2150 = vrot.lane.b32.xlu0 %v2119, 95
  %v2151 = vpop.permute.xlu0 %2150
  %2152 = vrot.lane.b32.xlu0 %v2120, 95
  %v2153 = vpop.permute.xlu0 %2152
  %2154 = vrot.lane.b32.xlu0 %v2121, 95
  %v2155 = vpop.permute.xlu0 %2154
  %2156 = vrot.lane.b32.xlu0 %v2122, 95
  %v2157 = vpop.permute.xlu0 %2156
  %vm2158 = vcmask 777216
  %v2159 = vsel %vm2158, %v2139, %v2141
  %v2160 = vsel %vm2158, %v2141, %v2143
  %v2161 = vsel %vm2158, %v2143, %v2145
  %v2162 = vsel %vm2158, %v2145, %v2147
  %v2163 = vsel %vm2158, %v2149, %v2151
  %v2164 = vsel %vm2158, %v2151, %v2153
  %v2165 = vsel %vm2158, %v2153, %v2155
  %v2166 = vsel %vm2158, %v2155, %v2157
  %v2176 = vsel %vm83, %v2124, 0
  %v2179 = vsel %vm83, %v2125, 0
  %v2182 = vsel %vm83, %v2126, 0
  %v2185 = vsel %vm83, %v2127, 0
  %2187 = vmatprep.subr.mxu0 %v2160
  %2188 = vmatpush1.msra.mxu0 %v2159
  %2189 = vmatprep.subr.mxu0 %v2164
  %2190 = vmatpush1.msra.mxu0 %v2163
  %2191 = vmatprep.subr.mxu0 0.0
  %2192 = vmatpush1.msra.mxu0 0.0
  %2193 = vmatprep.subr.mxu0 0.0
  %2194 = vmatpush1.msra.mxu0 0.0
  %2195 = vmatprep.subr.mxu0 0.0
  %2196 = vmatpush1.msra.mxu0 0.0
  %2197 = vmatprep.subr.mxu0 0.0
  %2198 = vmatpush1.msra.mxu0 0.0
  %2199 = vmatprep.subr.mxu0 0.0
  %2200 = vmatpush1.msra.mxu0 0.0
  %2201 = vmatprep.subr.mxu0 0.0
  %2202 = vmatpush1.msra.mxu0 0.0
  %2203 = vmatprep.subr.mxu0 0.0
  %2204 = vmatpush1.msra.mxu0 0.0
  %2205 = vmatprep.subr.mxu0 0.0
  %2206 = vmatpush1.msra.mxu0 0.0
  %2207 = vmatprep.subr.mxu0 0.0
  %2208 = vmatpush1.msra.mxu0 0.0
  %2209 = vmatprep.subr.mxu0 0.0
  %2210 = vmatpush1.msra.mxu0 0.0
  %2211 = vmatprep.subr.mxu0 0.0
  %2212 = vmatpush1.msra.mxu0 0.0
  %2213 = vmatprep.subr.mxu0 0.0
  %2214 = vmatpush1.msra.mxu0 0.0
  %2215 = vmatprep.subr.mxu0 0.0
  %2216 = vmatpush1.msra.mxu0 0.0
  %2217 = vmatprep.subr.mxu0 0.0
  %2218 = vmatpush1.msra.mxu0 0.0
  %2219 = vmatprep.subr.mxu0 0.0
  %2220 = vmatpush1.msra.mxu0 0.0
  %2221 = vmatprep.subr.mxu0 0.0
  %2222 = vmatpush1.msra.mxu0 0.0
  %2223 = vmatprep.subr.mxu0 0.0
  %2224 = vmatpush1.msra.mxu0 0.0
  %2225 = vmatprep.subr.mxu0 0.0
  %2226 = vmatpush1.msra.mxu0 0.0
  %2227 = vmatprep.subr.mxu0 0.0
  %2228 = vmatpush1.msra.mxu0 0.0
  %2229 = vmatprep.subr.mxu0 0.0
  %2230 = vmatpush1.msra.mxu0 0.0
  %2231 = vmatprep.subr.mxu0 0.0
  %2232 = vmatpush1.msra.mxu0 0.0
  %2233 = vmatprep.subr.mxu0 0.0
  %2234 = vmatpush1.msra.mxu0 0.0
  %2235 = vmatprep.subr.mxu0 0.0
  %2236 = vmatpush1.msra.mxu0 0.0
  %2237 = vmatprep.subr.mxu0 0.0
  %2238 = vmatpush1.msra.mxu0 0.0
  %2239 = vmatprep.subr.mxu0 0.0
  %2240 = vmatpush1.msra.mxu0 0.0
  %2241 = vmatprep.subr.mxu0 0.0
  %2242 = vmatpush1.msra.mxu0 0.0
  %2243 = vmatprep.subr.mxu0 0.0
  %2244 = vmatpush1.msra.mxu0 0.0
  %2245 = vmatprep.subr.mxu0 0.0
  %2246 = vmatpush1.msra.mxu0 0.0
  %2247 = vmatprep.subr.mxu0 0.0
  %2248 = vmatpush1.msra.mxu0 0.0
  %2249 = vmatprep.subr.mxu0 0.0
  %2250 = vmatpush1.msra.mxu0 0.0
  %2251 = vmatprep.mubr.f32.mxu0 0.0
  %2252 = vmatmul.mubr.f32.gmra.mrb[0].mxu0 %v2176
  %v2253 = vpop.f32.mrb[0].mxu0
  %v2254 = vadd.f32 0.0, %v2253
  %v2255 = vpop.f32.mrb[0].mxu0
  %v2256 = vadd.f32 0.0, %v2255
  %2257 = vmatprep.mubr.f32.mxu0 0.0
  %2258 = vmatmul.mubr.f32.gmra.mrb[0].mxu0 %v2179
  %v2259 = vpop.f32.mrb[0].mxu0
  %v2260 = vadd.f32 0.0, %v2259
  %v2261 = vpop.f32.mrb[0].mxu0
  %v2262 = vadd.f32 0.0, %v2261
  %2263 = vmatprep.mubr.f32.mxu0 0.0
  %2264 = vmatmul.mubr.f32.gmra.mrb[0].mxu0 %v2182
  %v2265 = vpop.f32.mrb[0].mxu0
  %v2266 = vadd.f32 0.0, %v2265
  %v2267 = vpop.f32.mrb[0].mxu0
  %v2268 = vadd.f32 0.0, %v2267
  %2269 = vmatprep.mubr.f32.mxu0 0.0
  %2270 = vmatmul.mubr.f32.gmra.mrb[0].mxu0 %v2185
  %v2271 = vpop.f32.mrb[0].mxu0
  %v2272 = vadd.f32 0.0, %v2271
  %v2273 = vpop.f32.mrb[0].mxu0
  %v2274 = vadd.f32 0.0, %v2273
  %2275 = vdwg.mxu0
  %2276 = vmatprep.subr.mxu0 %v2162
  %2277 = vmatpush1.msra.mxu0 %v2161
  %2278 = vmatprep.subr.mxu0 %v2166
  %2279 = vmatpush1.msra.mxu0 %v2165
  %2280 = vmatprep.subr.mxu0 0.0
  %2281 = vmatpush1.msra.mxu0 0.0
  %2282 = vmatprep.subr.mxu0 0.0
  %2283 = vmatpush1.msra.mxu0 0.0
  %2284 = vmatprep.subr.mxu0 0.0
  %2285 = vmatpush1.msra.mxu0 0.0
  %2286 = vmatprep.subr.mxu0 0.0
  %2287 = vmatpush1.msra.mxu0 0.0
  %2288 = vmatprep.subr.mxu0 0.0
  %2289 = vmatpush1.msra.mxu0 0.0
  %2290 = vmatprep.subr.mxu0 0.0
  %2291 = vmatpush1.msra.mxu0 0.0
  %2292 = vmatprep.subr.mxu0 0.0
  %2293 = vmatpush1.msra.mxu0 0.0
  %2294 = vmatprep.subr.mxu0 0.0
  %2295 = vmatpush1.msra.mxu0 0.0
  %2296 = vmatprep.subr.mxu0 0.0
  %2297 = vmatpush1.msra.mxu0 0.0
  %2298 = vmatprep.subr.mxu0 0.0
  %2299 = vmatpush1.msra.mxu0 0.0
  %2300 = vmatprep.subr.mxu0 0.0
  %2301 = vmatpush1.msra.mxu0 0.0
  %2302 = vmatprep.subr.mxu0 0.0
  %2303 = vmatpush1.msra.mxu0 0.0
  %2304 = vmatprep.subr.mxu0 0.0
  %2305 = vmatpush1.msra.mxu0 0.0
  %2306 = vmatprep.subr.mxu0 0.0
  %2307 = vmatpush1.msra.mxu0 0.0
  %2308 = vmatprep.subr.mxu0 0.0
  %2309 = vmatpush1.msra.mxu0 0.0
  %2310 = vmatprep.subr.mxu0 0.0
  %2311 = vmatpush1.msra.mxu0 0.0
  %2312 = vmatprep.subr.mxu0 0.0
  %2313 = vmatpush1.msra.mxu0 0.0
  %2314 = vmatprep.subr.mxu0 0.0
  %2315 = vmatpush1.msra.mxu0 0.0
  %2316 = vmatprep.subr.mxu0 0.0
  %2317 = vmatpush1.msra.mxu0 0.0
  %2318 = vmatprep.subr.mxu0 0.0
  %2319 = vmatpush1.msra.mxu0 0.0
  %2320 = vmatprep.subr.mxu0 0.0
  %2321 = vmatpush1.msra.mxu0 0.0
  %2322 = vmatprep.subr.mxu0 0.0
  %2323 = vmatpush1.msra.mxu0 0.0
  %2324 = vmatprep.subr.mxu0 0.0
  %2325 = vmatpush1.msra.mxu0 0.0
  %2326 = vmatprep.subr.mxu0 0.0
  %2327 = vmatpush1.msra.mxu0 0.0
  %2328 = vmatprep.subr.mxu0 0.0
  %2329 = vmatpush1.msra.mxu0 0.0
  %2330 = vmatprep.subr.mxu0 0.0
  %2331 = vmatpush1.msra.mxu0 0.0
  %2332 = vmatprep.subr.mxu0 0.0
  %2333 = vmatpush1.msra.mxu0 0.0
  %2334 = vmatprep.subr.mxu0 0.0
  %2335 = vmatpush1.msra.mxu0 0.0
  %2336 = vmatprep.subr.mxu0 0.0
  %2337 = vmatpush1.msra.mxu0 0.0
  %2338 = vmatprep.subr.mxu0 0.0
  %2339 = vmatpush1.msra.mxu0 0.0
  %2340 = vmatprep.mubr.f32.mxu0 0.0
  %2341 = vmatmul.mubr.f32.gmra.mrb[0].mxu0 %v2176
  %v2342 = vpop.f32.mrb[0].mxu0
  %v2343 = vadd.f32 0.0, %v2342
  %v2344 = vpop.f32.mrb[0].mxu0
  %v2345 = vadd.f32 0.0, %v2344
  %2346 = vmatprep.mubr.f32.mxu0 0.0
  %2347 = vmatmul.mubr.f32.gmra.mrb[0].mxu0 %v2179
  %v2348 = vpop.f32.mrb[0].mxu0
  %v2349 = vadd.f32 0.0, %v2348
  %v2350 = vpop.f32.mrb[0].mxu0
  %v2351 = vadd.f32 0.0, %v2350
  %2352 = vmatprep.mubr.f32.mxu0 0.0
  %2353 = vmatmul.mubr.f32.gmra.mrb[0].mxu0 %v2182
  %v2354 = vpop.f32.mrb[0].mxu0
  %v2355 = vadd.f32 0.0, %v2354
  %v2356 = vpop.f32.mrb[0].mxu0
  %v2357 = vadd.f32 0.0, %v2356
  %2358 = vmatprep.mubr.f32.mxu0 0.0
  %2359 = vmatmul.mubr.f32.gmra.mrb[0].mxu0 %v2185
  %v2360 = vpop.f32.mrb[0].mxu0
  %v2361 = vadd.f32 0.0, %v2360
  %v2362 = vpop.f32.mrb[0].mxu0
  %v2363 = vadd.f32 0.0, %v2362
  %2364 = vdwg.mxu0
  %v2365 = vadd.f32 %v2061, %v2254
  %v2366 = vadd.f32 %v2062, %v2256
  %v2367 = vadd.f32 %v2063, %v2343
  %v2368 = vadd.f32 %v2064, %v2345
  %v2369 = vadd.f32 %v2065, %v2260
  %v2370 = vadd.f32 %v2066, %v2262
  %v2371 = vadd.f32 %v2067, %v2349
  %v2372 = vadd.f32 %v2068, %v2351
  %v2373 = vadd.f32 %v2069, %v2266
  %v2374 = vadd.f32 %v2070, %v2268
  %v2375 = vadd.f32 %v2071, %v2355
  %v2376 = vadd.f32 %v2072, %v2357
  %v2377 = vadd.f32 %v2073, %v2272
  %v2378 = vadd.f32 %v2074, %v2274
  %v2379 = vadd.f32 %v2075, %v2361
  %v2380 = vadd.f32 %v2076, %v2363
  %s2381 = scalar_lea.vmem %s2, 32
  %v2382 = vld [vmem:[%s2381] sm:$0xf]
  %v2384 = vlaneseq
  %v2385 = vshrl.u32 %v2384, 7
  %v2386 = vsub.s32 0, %v2385
  %v2387 = vrot.slane %v2382, %v2386
  %v2388 = vlaneseq
  %v2389 = vshrl.u32 %v2388, 7
  %v2390 = vsub.s32 1, %v2389
  %v2391 = vrot.slane %v2382, %v2390
  %v2392 = vlaneseq
  %v2393 = vshrl.u32 %v2392, 7
  %v2394 = vsub.s32 2, %v2393
  %v2395 = vrot.slane %v2382, %v2394
  %v2396 = vlaneseq
  %v2397 = vshrl.u32 %v2396, 7
  %v2398 = vsub.s32 3, %v2397
  %v2399 = vrot.slane %v2382, %v2398
  %2400 = vrot.lane.b32.xlu0 %v2387, 34
  %v2401 = vpop.permute.xlu0 %2400
  %2402 = vrot.lane.b32.xlu0 %v2391, 34
  %v2403 = vpop.permute.xlu0 %2402
  %2404 = vrot.lane.b32.xlu0 %v2395, 34
  %v2405 = vpop.permute.xlu0 %2404
  %2406 = vrot.lane.b32.xlu0 %v2399, 34
  %v2407 = vpop.permute.xlu0 %2406
  %vm2408 = vcmask 277504
  %v2409 = vsel %vm2408, %v2401, %v2403
  %v2410 = vsel %vm2408, %v2403, %v2405
  %v2411 = vsel %vm2408, %v2405, %v2407
  %v2417 = vmul.f32 %v290, %v2401
  %v2418 = vmul.f32 %v291, %v2409
  %v2419 = vmul.f32 %v292, %v2410
  %v2420 = vmul.f32 %v293, %v2411
  %v2421 = vmul.f32 %v294, %v2407
  %v2422 = vmul.f32 %v295, %v2401
  %v2423 = vmul.f32 %v296, %v2409
  %v2424 = vmul.f32 %v297, %v2410
  %v2425 = vmul.f32 %v298, %v2411
  %v2426 = vmul.f32 %v299, %v2407
  %s2427 = scalar_lea.vmem %s0, 256
  %v2428 = vld [vmem:[%s2427] sm:$0xff]
  %v2429 = vld [vmem:[%s2427 + $0x8] sm:$0xff]
  %v2430 = vld [vmem:[%s2427 + $0x10] sm:$0xff]
  %v2431 = vld [vmem:[%s2427 + $0x18] sm:$0xff]
  %2442 = vrot.lane.b32.xlu0 %v2417, 94
  %v2443 = vpop.permute.xlu0 %2442
  %2444 = vrot.lane.b32.xlu0 %v2418, 94
  %v2445 = vpop.permute.xlu0 %2444
  %2446 = vrot.lane.b32.xlu0 %v2419, 94
  %v2447 = vpop.permute.xlu0 %2446
  %2448 = vrot.lane.b32.xlu0 %v2420, 94
  %v2449 = vpop.permute.xlu0 %2448
  %2450 = vrot.lane.b32.xlu0 %v2421, 94
  %v2451 = vpop.permute.xlu0 %2450
  %2452 = vrot.lane.b32.xlu0 %v2422, 94
  %v2453 = vpop.permute.xlu0 %2452
  %2454 = vrot.lane.b32.xlu0 %v2423, 94
  %v2455 = vpop.permute.xlu0 %2454
  %2456 = vrot.lane.b32.xlu0 %v2424, 94
  %v2457 = vpop.permute.xlu0 %2456
  %2458 = vrot.lane.b32.xlu0 %v2425, 94
  %v2459 = vpop.permute.xlu0 %2458
  %2460 = vrot.lane.b32.xlu0 %v2426, 94
  %v2461 = vpop.permute.xlu0 %2460
  %vm2462 = vcmask 769024
  %v2463 = vsel %vm2462, %v2443, %v2445
  %v2464 = vsel %vm2462, %v2445, %v2447
  %v2465 = vsel %vm2462, %v2447, %v2449
  %v2466 = vsel %vm2462, %v2449, %v2451
  %v2467 = vsel %vm2462, %v2453, %v2455
  %v2468 = vsel %vm2462, %v2455, %v2457
  %v2469 = vsel %vm2462, %v2457, %v2459
  %v2470 = vsel %vm2462, %v2459, %v2461
  %v2480 = vsel %vm83, %v2428, 0
  %v2483 = vsel %vm83, %v2429, 0
  %v2486 = vsel %vm83, %v2430, 0
  %v2489 = vsel %vm83, %v2431, 0
  %2491 = vmatprep.subr.mxu0 %v2464
  %2492 = vmatpush1.msra.mxu0 %v2463
  %2493 = vmatprep.subr.mxu0 %v2468
  %2494 = vmatpush1.msra.mxu0 %v2467
  %2495 = vmatprep.subr.mxu0 0.0
  %2496 = vmatpush1.msra.mxu0 0.0
  %2497 = vmatprep.subr.mxu0 0.0
  %2498 = vmatpush1.msra.mxu0 0.0
  %2499 = vmatprep.subr.mxu0 0.0
  %2500 = vmatpush1.msra.mxu0 0.0
  %2501 = vmatprep.subr.mxu0 0.0
  %2502 = vmatpush1.msra.mxu0 0.0
  %2503 = vmatprep.subr.mxu0 0.0
  %2504 = vmatpush1.msra.mxu0 0.0
  %2505 = vmatprep.subr.mxu0 0.0
  %2506 = vmatpush1.msra.mxu0 0.0
  %2507 = vmatprep.subr.mxu0 0.0
  %2508 = vmatpush1.msra.mxu0 0.0
  %2509 = vmatprep.subr.mxu0 0.0
  %2510 = vmatpush1.msra.mxu0 0.0
  %2511 = vmatprep.subr.mxu0 0.0
  %2512 = vmatpush1.msra.mxu0 0.0
  %2513 = vmatprep.subr.mxu0 0.0
  %2514 = vmatpush1.msra.mxu0 0.0
  %2515 = vmatprep.subr.mxu0 0.0
  %2516 = vmatpush1.msra.mxu0 0.0
  %2517 = vmatprep.subr.mxu0 0.0
  %2518 = vmatpush1.msra.mxu0 0.0
  %2519 = vmatprep.subr.mxu0 0.0
  %2520 = vmatpush1.msra.mxu0 0.0
  %2521 = vmatprep.subr.mxu0 0.0
  %2522 = vmatpush1.msra.mxu0 0.0
  %2523 = vmatprep.subr.mxu0 0.0
  %2524 = vmatpush1.msra.mxu0 0.0
  %2525 = vmatprep.subr.mxu0 0.0
  %2526 = vmatpush1.msra.mxu0 0.0
  %2527 = vmatprep.subr.mxu0 0.0
  %2528 = vmatpush1.msra.mxu0 0.0
  %2529 = vmatprep.subr.mxu0 0.0
  %2530 = vmatpush1.msra.mxu0 0.0
  %2531 = vmatprep.subr.mxu0 0.0
  %2532 = vmatpush1.msra.mxu0 0.0
  %2533 = vmatprep.subr.mxu0 0.0
  %2534 = vmatpush1.msra.mxu0 0.0
  %2535 = vmatprep.subr.mxu0 0.0
  %2536 = vmatpush1.msra.mxu0 0.0
  %2537 = vmatprep.subr.mxu0 0.0
  %2538 = vmatpush1.msra.mxu0 0.0
  %2539 = vmatprep.subr.mxu0 0.0
  %2540 = vmatpush1.msra.mxu0 0.0
  %2541 = vmatprep.subr.mxu0 0.0
  %2542 = vmatpush1.msra.mxu0 0.0
  %2543 = vmatprep.subr.mxu0 0.0
  %2544 = vmatpush1.msra.mxu0 0.0
  %2545 = vmatprep.subr.mxu0 0.0
  %2546 = vmatpush1.msra.mxu0 0.0
  %2547 = vmatprep.subr.mxu0 0.0
  %2548 = vmatpush1.msra.mxu0 0.0
  %2549 = vmatprep.subr.mxu0 0.0
  %2550 = vmatpush1.msra.mxu0 0.0
  %2551 = vmatprep.subr.mxu0 0.0
  %2552 = vmatpush1.msra.mxu0 0.0
  %2553 = vmatprep.subr.mxu0 0.0
  %2554 = vmatpush1.msra.mxu0 0.0
  %2555 = vmatprep.mubr.f32.mxu0 0.0
  %2556 = vmatmul.mubr.f32.gmra.mrb[0].mxu0 %v2480
  %v2557 = vpop.f32.mrb[0].mxu0
  %v2558 = vadd.f32 0.0, %v2557
  %v2559 = vpop.f32.mrb[0].mxu0
  %v2560 = vadd.f32 0.0, %v2559
  %2561 = vmatprep.mubr.f32.mxu0 0.0
  %2562 = vmatmul.mubr.f32.gmra.mrb[0].mxu0 %v2483
  %v2563 = vpop.f32.mrb[0].mxu0
  %v2564 = vadd.f32 0.0, %v2563
  %v2565 = vpop.f32.mrb[0].mxu0
  %v2566 = vadd.f32 0.0, %v2565
  %2567 = vmatprep.mubr.f32.mxu0 0.0
  %2568 = vmatmul.mubr.f32.gmra.mrb[0].mxu0 %v2486
  %v2569 = vpop.f32.mrb[0].mxu0
  %v2570 = vadd.f32 0.0, %v2569
  %v2571 = vpop.f32.mrb[0].mxu0
  %v2572 = vadd.f32 0.0, %v2571
  %2573 = vmatprep.mubr.f32.mxu0 0.0
  %2574 = vmatmul.mubr.f32.gmra.mrb[0].mxu0 %v2489
  %v2575 = vpop.f32.mrb[0].mxu0
  %v2576 = vadd.f32 0.0, %v2575
  %v2577 = vpop.f32.mrb[0].mxu0
  %v2578 = vadd.f32 0.0, %v2577
  %2579 = vdwg.mxu0
  %2580 = vmatprep.subr.mxu0 %v2466
  %2581 = vmatpush1.msra.mxu0 %v2465
  %2582 = vmatprep.subr.mxu0 %v2470
  %2583 = vmatpush1.msra.mxu0 %v2469
  %2584 = vmatprep.subr.mxu0 0.0
  %2585 = vmatpush1.msra.mxu0 0.0
  %2586 = vmatprep.subr.mxu0 0.0
  %2587 = vmatpush1.msra.mxu0 0.0
  %2588 = vmatprep.subr.mxu0 0.0
  %2589 = vmatpush1.msra.mxu0 0.0
  %2590 = vmatprep.subr.mxu0 0.0
  %2591 = vmatpush1.msra.mxu0 0.0
  %2592 = vmatprep.subr.mxu0 0.0
  %2593 = vmatpush1.msra.mxu0 0.0
  %2594 = vmatprep.subr.mxu0 0.0
  %2595 = vmatpush1.msra.mxu0 0.0
  %2596 = vmatprep.subr.mxu0 0.0
  %2597 = vmatpush1.msra.mxu0 0.0
  %2598 = vmatprep.subr.mxu0 0.0
  %2599 = vmatpush1.msra.mxu0 0.0
  %2600 = vmatprep.subr.mxu0 0.0
  %2601 = vmatpush1.msra.mxu0 0.0
  %2602 = vmatprep.subr.mxu0 0.0
  %2603 = vmatpush1.msra.mxu0 0.0
  %2604 = vmatprep.subr.mxu0 0.0
  %2605 = vmatpush1.msra.mxu0 0.0
  %2606 = vmatprep.subr.mxu0 0.0
  %2607 = vmatpush1.msra.mxu0 0.0
  %2608 = vmatprep.subr.mxu0 0.0
  %2609 = vmatpush1.msra.mxu0 0.0
  %2610 = vmatprep.subr.mxu0 0.0
  %2611 = vmatpush1.msra.mxu0 0.0
  %2612 = vmatprep.subr.mxu0 0.0
  %2613 = vmatpush1.msra.mxu0 0.0
  %2614 = vmatprep.subr.mxu0 0.0
  %2615 = vmatpush1.msra.mxu0 0.0
  %2616 = vmatprep.subr.mxu0 0.0
  %2617 = vmatpush1.msra.mxu0 0.0
  %2618 = vmatprep.subr.mxu0 0.0
  %2619 = vmatpush1.msra.mxu0 0.0
  %2620 = vmatprep.subr.mxu0 0.0
  %2621 = vmatpush1.msra.mxu0 0.0
  %2622 = vmatprep.subr.mxu0 0.0
  %2623 = vmatpush1.msra.mxu0 0.0
  %2624 = vmatprep.subr.mxu0 0.0
  %2625 = vmatpush1.msra.mxu0 0.0
  %2626 = vmatprep.subr.mxu0 0.0
  %2627 = vmatpush1.msra.mxu0 0.0
  %2628 = vmatprep.subr.mxu0 0.0
  %2629 = vmatpush1.msra.mxu0 0.0
  %2630 = vmatprep.subr.mxu0 0.0
  %2631 = vmatpush1.msra.mxu0 0.0
  %2632 = vmatprep.subr.mxu0 0.0
  %2633 = vmatpush1.msra.mxu0 0.0
  %2634 = vmatprep.subr.mxu0 0.0
  %2635 = vmatpush1.msra.mxu0 0.0
  %2636 = vmatprep.subr.mxu0 0.0
  %2637 = vmatpush1.msra.mxu0 0.0
  %2638 = vmatprep.subr.mxu0 0.0
  %2639 = vmatpush1.msra.mxu0 0.0
  %2640 = vmatprep.subr.mxu0 0.0
  %2641 = vmatpush1.msra.mxu0 0.0
  %2642 = vmatprep.subr.mxu0 0.0
  %2643 = vmatpush1.msra.mxu0 0.0
  %2644 = vmatprep.mubr.f32.mxu0 0.0
  %2645 = vmatmul.mubr.f32.gmra.mrb[0].mxu0 %v2480
  %v2646 = vpop.f32.mrb[0].mxu0
  %v2647 = vadd.f32 0.0, %v2646
  %v2648 = vpop.f32.mrb[0].mxu0
  %v2649 = vadd.f32 0.0, %v2648
  %2650 = vmatprep.mubr.f32.mxu0 0.0
  %2651 = vmatmul.mubr.f32.gmra.mrb[0].mxu0 %v2483
  %v2652 = vpop.f32.mrb[0].mxu0
  %v2653 = vadd.f32 0.0, %v2652
  %v2654 = vpop.f32.mrb[0].mxu0
  %v2655 = vadd.f32 0.0, %v2654
  %2656 = vmatprep.mubr.f32.mxu0 0.0
  %2657 = vmatmul.mubr.f32.gmra.mrb[0].mxu0 %v2486
  %v2658 = vpop.f32.mrb[0].mxu0
  %v2659 = vadd.f32 0.0, %v2658
  %v2660 = vpop.f32.mrb[0].mxu0
  %v2661 = vadd.f32 0.0, %v2660
  %2662 = vmatprep.mubr.f32.mxu0 0.0
  %2663 = vmatmul.mubr.f32.gmra.mrb[0].mxu0 %v2489
  %v2664 = vpop.f32.mrb[0].mxu0
  %v2665 = vadd.f32 0.0, %v2664
  %v2666 = vpop.f32.mrb[0].mxu0
  %v2667 = vadd.f32 0.0, %v2666
  %2668 = vdwg.mxu0
  %v2669 = vadd.f32 %v2365, %v2558
  %v2670 = vadd.f32 %v2366, %v2560
  %v2671 = vadd.f32 %v2367, %v2647
  %v2672 = vadd.f32 %v2368, %v2649
  %v2673 = vadd.f32 %v2369, %v2564
  %v2674 = vadd.f32 %v2370, %v2566
  %v2675 = vadd.f32 %v2371, %v2653
  %v2676 = vadd.f32 %v2372, %v2655
  %v2677 = vadd.f32 %v2373, %v2570
  %v2678 = vadd.f32 %v2374, %v2572
  %v2679 = vadd.f32 %v2375, %v2659
  %v2680 = vadd.f32 %v2376, %v2661
  %v2681 = vadd.f32 %v2377, %v2576
  %v2682 = vadd.f32 %v2378, %v2578
  %v2683 = vadd.f32 %v2379, %v2665
  %v2684 = vadd.f32 %v2380, %v2667
  %v2685 = vadd.f32 %v2669, 3.0
  %v2686 = vadd.f32 %v2670, 3.0
  %v2687 = vadd.f32 %v2671, 3.0
  %v2688 = vadd.f32 %v2672, 3.0
  %v2689 = vadd.f32 %v2673, 3.0
  %v2690 = vadd.f32 %v2674, 3.0
  %v2691 = vadd.f32 %v2675, 3.0
  %v2692 = vadd.f32 %v2676, 3.0
  %v2693 = vadd.f32 %v2677, 3.0
  %v2694 = vadd.f32 %v2678, 3.0
  %v2695 = vadd.f32 %v2679, 3.0
  %v2696 = vadd.f32 %v2680, 3.0
  %v2697 = vadd.f32 %v2681, 3.0
  %v2698 = vadd.f32 %v2682, 3.0
  %v2699 = vadd.f32 %v2683, 3.0
  %v2700 = vadd.f32 %v2684, 3.0
  %v2701 = vmax.f32 %v2685, 0.0
  %v2702 = vmax.f32 %v2686, 0.0
  %v2703 = vmax.f32 %v2687, 0.0
  %v2704 = vmax.f32 %v2688, 0.0
  %v2705 = vmax.f32 %v2689, 0.0
  %v2706 = vmax.f32 %v2690, 0.0
  %v2707 = vmax.f32 %v2691, 0.0
  %v2708 = vmax.f32 %v2692, 0.0
  %v2709 = vmax.f32 %v2693, 0.0
  %v2710 = vmax.f32 %v2694, 0.0
  %v2711 = vmax.f32 %v2695, 0.0
  %v2712 = vmax.f32 %v2696, 0.0
  %v2713 = vmax.f32 %v2697, 0.0
  %v2714 = vmax.f32 %v2698, 0.0
  %v2715 = vmax.f32 %v2699, 0.0
  %v2716 = vmax.f32 %v2700, 0.0
  %v2717 = vmin.f32 %v2701, 6.0
  %v2718 = vmin.f32 %v2702, 6.0
  %v2719 = vmin.f32 %v2703, 6.0
  %v2720 = vmin.f32 %v2704, 6.0
  %v2721 = vmin.f32 %v2705, 6.0
  %v2722 = vmin.f32 %v2706, 6.0
  %v2723 = vmin.f32 %v2707, 6.0
  %v2724 = vmin.f32 %v2708, 6.0
  %v2725 = vmin.f32 %v2709, 6.0
  %v2726 = vmin.f32 %v2710, 6.0
  %v2727 = vmin.f32 %v2711, 6.0
  %v2728 = vmin.f32 %v2712, 6.0
  %v2729 = vmin.f32 %v2713, 6.0
  %v2730 = vmin.f32 %v2714, 6.0
  %v2731 = vmin.f32 %v2715, 6.0
  %v2732 = vmin.f32 %v2716, 6.0
  %v2733 = vmul.f32 %v2669, %v2717
  %v2734 = vmul.f32 %v2670, %v2718
  %v2735 = vmul.f32 %v2671, %v2719
  %v2736 = vmul.f32 %v2672, %v2720
  %v2737 = vmul.f32 %v2673, %v2721
  %v2738 = vmul.f32 %v2674, %v2722
  %v2739 = vmul.f32 %v2675, %v2723
  %v2740 = vmul.f32 %v2676, %v2724
  %v2741 = vmul.f32 %v2677, %v2725
  %v2742 = vmul.f32 %v2678, %v2726
  %v2743 = vmul.f32 %v2679, %v2727
  %v2744 = vmul.f32 %v2680, %v2728
  %v2745 = vmul.f32 %v2681, %v2729
  %v2746 = vmul.f32 %v2682, %v2730
  %v2747 = vmul.f32 %v2683, %v2731
  %v2748 = vmul.f32 %v2684, %v2732
  %v2749 = vmul.f32 %v2733, 0.16666667
  %v2750 = vmul.f32 %v2734, 0.16666667
  %v2751 = vmul.f32 %v2735, 0.16666667
  %v2752 = vmul.f32 %v2736, 0.16666667
  %v2753 = vmul.f32 %v2737, 0.16666667
  %v2754 = vmul.f32 %v2738, 0.16666667
  %v2755 = vmul.f32 %v2739, 0.16666667
  %v2756 = vmul.f32 %v2740, 0.16666667
  %v2757 = vmul.f32 %v2741, 0.16666667
  %v2758 = vmul.f32 %v2742, 0.16666667
  %v2759 = vmul.f32 %v2743, 0.16666667
  %v2760 = vmul.f32 %v2744, 0.16666667
  %v2761 = vmul.f32 %v2745, 0.16666667
  %v2762 = vmul.f32 %v2746, 0.16666667
  %v2763 = vmul.f32 %v2747, 0.16666667
  %v2764 = vmul.f32 %v2748, 0.16666667
  %2765 = vst [vmem:[%s4] sm:$0xff] %v2749
  %2766 = vst [vmem:[%s4 + $0x8] sm:$0xff] %v2750
  %2767 = vst [vmem:[%s4 + $0x10] sm:$0xff] %v2753
  %2768 = vst [vmem:[%s4 + $0x18] sm:$0xff] %v2754
  %2769 = vst [vmem:[%s4 + $0x20] sm:$0xff] %v2757
  %2770 = vst [vmem:[%s4 + $0x28] sm:$0xff] %v2758
  %2771 = vst [vmem:[%s4 + $0x30] sm:$0xff] %v2761
  %2772 = vst [vmem:[%s4 + $0x38] sm:$0xff] %v2762
  %s2773 = scalar_lea.vmem %s4, 64
  %2774 = vst [vmem:[%s2773] sm:$0xff] %v2751
  %2775 = vst [vmem:[%s2773 + $0x8] sm:$0xff] %v2752
  %2776 = vst [vmem:[%s2773 + $0x10] sm:$0xff] %v2755
  %2777 = vst [vmem:[%s2773 + $0x18] sm:$0xff] %v2756
  %2778 = vst [vmem:[%s2773 + $0x20] sm:$0xff] %v2759
  %2779 = vst [vmem:[%s2773 + $0x28] sm:$0xff] %v2760
  %2780 = vst [vmem:[%s2773 + $0x30] sm:$0xff] %v2763
  %2781 = vst [vmem:[%s2773 + $0x38] sm:$0xff] %v2764
  // Predicated region
  $region18: #{conv3x3_hardswish.1} parent=0 // pred_check
    _
  $region19: #{conv3x3_hardswish.1} parent=0 // pred_check_branch
    %2783 = sbr.rel (0) target = $region21
  $region20: #{conv3x3_hardswish.1} parent=0 // pred_region
    _
  $region21: #{conv3x3_hardswish.1} parent=0 // pred_fallthru
    _
  // Predicated region
  $region22: #{conv3x3_hardswish.1} parent=0 // pred_check
    _
  $region23: #{conv3x3_hardswish.1} parent=0 // pred_check_branch
    %2785 = sbr.rel (0) target = $region25
  $region24: #{conv3x3_hardswish.1} parent=0 // pred_region
    _
  $region25: #{conv3x3_hardswish.1} parent=0 // pred_fallthru
    _

</llo_original>
